<compile_context>
chip_gen: v7x
topology: tpu7x:2x2x1
jax: 0.10.0
libtpu: 0.0.40
codegen_flags: <defaults>
</compile_context>

<pallas_src>
import functools

import jax
import jax.numpy as jnp
from jax.experimental import pallas as pl
from jax.experimental.pallas import tpu as pltpu


# ----------------------------------------------------------------------------
# Fused kernel: all GRU layers + linear head in one invocation (no grid).
# Ref order: x, [w_ih_cat, w_hh_cat, b_i_cat, b_hh_n] * n_layers,
#            w_lin, b_lin, out, hn, seq_scratch
# ----------------------------------------------------------------------------
def _make_fused_rnn_kernel(n_layers, S, B, H):
    def kernel(*refs):
        x_ref = refs[0]                           # (S*B, Din) bf16
        w_lin_ref = refs[1 + 4 * n_layers]        # (1, H)  f32
        b_lin_ref = refs[2 + 4 * n_layers]        # (1, 1)  f32
        out_ref = refs[3 + 4 * n_layers]          # (S*B, 1) f32
        hn_ref = refs[4 + 4 * n_layers]           # (n_layers, B, H) f32
        seq_ref = refs[5 + 4 * n_layers]          # VMEM scratch (S*B, H) f32

        for layer in range(n_layers):
            w_ih_ref = refs[1 + 4 * layer]        # (Din_l, 3H) bf16, columns [r|z|n]
            w_hh_ref = refs[2 + 4 * layer]        # (H, 3H)     bf16, columns [r|z|n]
            b_i_ref = refs[3 + 4 * layer]         # (1, 3H) f32 (r/z: b_ih+b_hh; n: b_ih)
            b_hn_ref = refs[4 + 4 * layer]        # (1, H)  f32 (b_hh of the n gate)

            # Layer input, flattened sequence (S*B, Din_l), bf16 for the MXU.
            if layer == 0:
                seq_in = x_ref[...]
            else:
                seq_in = seq_ref[...].astype(jnp.bfloat16)

            # ---- ONE hoisted input-side gate matmul per layer (off the serial chain)
            gi = (jnp.dot(seq_in, w_ih_ref[...],
                          preferred_element_type=jnp.float32)
                  + b_i_ref[...])                 # (S*B, 3H) f32

            w_hh = w_hh_ref[...]                  # (H, 3H) bf16, reused every step
            b_hn = jnp.broadcast_to(b_hn_ref[...], (B, H))   # hoisted broadcast

            h = jnp.zeros((B, H), jnp.float32)
            for t in range(S):                    # S is small & static: full unroll
                lo = t * B
                # ONE fused recurrent matmul per step (single MXU push/pop).
                gh = jnp.dot(h.astype(jnp.bfloat16), w_hh,
                             preferred_element_type=jnp.float32)      # (B, 3H)
                r = jax.nn.sigmoid(gi[lo:lo + B, 0:H] + gh[:, 0:H])
                z = jax.nn.sigmoid(gi[lo:lo + B, H:2 * H] + gh[:, H:2 * H])
                n = jnp.tanh(gi[lo:lo + B, 2 * H:3 * H]
                             + r * (gh[:, 2 * H:3 * H] + b_hn))
                h = (1.0 - z) * n + z * h
                seq_ref[lo:lo + B, :] = h         # static-offset VMEM store

            hn_ref[layer] = h                     # final hidden state of this layer
            # (nn.GRU inter-layer dropout is identity in eval mode.)

        # ---- linear head off the MXU: (S*B, H) * (1, H) -> lane-sum (VPU + XLU)
        out_ref[...] = (jnp.sum(seq_ref[...] * w_lin_ref[...],
                                axis=-1, keepdims=True)
                        + b_lin_ref[...])

    return kernel


# ----------------------------------------------------------------------------
# Forward pass (matches RNN.forward): x -> (out, hn)
#   x  : (S, B, N, F)   out: (S, B, 1)   hn : (n_layers, B, out_feat)
# ----------------------------------------------------------------------------
@functools.partial(jax.jit, static_argnames=("n_layers",))
def rnn_forward(x, packed, n_layers):
    S, B, N, F = x.shape
    Din = N * F
    H = packed["w_hh_cat_0"].shape[0]

    # torch.stack + reshape, additionally flattening (S, B) -> S*B rows (row s*B + b).
    x2 = x.reshape(S * B, Din).astype(jnp.bfloat16)

    operands = [x2]
    in_specs = [pl.BlockSpec((S * B, Din), lambda: (0, 0))]
    for layer in range(n_layers):
        din_l = Din if layer == 0 else H
        operands += [packed[f"w_ih_cat_{layer}"], packed[f"w_hh_cat_{layer}"],
                     packed[f"b_i_cat_{layer}"], packed[f"b_hh_n_{layer}"]]
        in_specs += [
            pl.BlockSpec((din_l, 3 * H), lambda: (0, 0)),
            pl.BlockSpec((H, 3 * H), lambda: (0, 0)),
            pl.BlockSpec((1, 3 * H), lambda: (0, 0)),
            pl.BlockSpec((1, H), lambda: (0, 0)),
        ]
    operands += [packed["w_lin_row"], packed["b_lin"]]
    in_specs += [pl.BlockSpec((1, H), lambda: (0, 0)),
                 pl.BlockSpec((1, 1), lambda: (0, 0))]

    out_flat, hn = pl.pallas_call(
        _make_fused_rnn_kernel(n_layers, S, B, H),
        out_shape=(jax.ShapeDtypeStruct((S * B, 1), jnp.float32),
                   jax.ShapeDtypeStruct((n_layers, B, H), jnp.float32)),
        in_specs=in_specs,
        out_specs=(pl.BlockSpec((S * B, 1), lambda: (0, 0)),
                   pl.BlockSpec((n_layers, B, H), lambda: (0, 0, 0))),
        scratch_shapes=[pltpu.VMEM((S * B, H), jnp.float32)],
        compiler_params=pltpu.CompilerParams(
            vmem_limit_bytes=16 * 1024 * 1024,   # tiny footprint, safe on every gen
        ),
    )(*operands)

    return out_flat.reshape(S, B, 1), hn


# ----------------------------------------------------------------------------
# Parameter construction in the native PyTorch layout (deterministic uniform init):
#   w_ih (3H, Din), w_hh (3H, H), b_* (3H,), gate order [r, z, n];
#   linear: w_lin (1, H), b_lin (1,)
# ----------------------------------------------------------------------------
def init_params(key, in_feat, out_feat, n_layers):
    params = {}
    k = 1.0 / jnp.sqrt(out_feat)
    for layer in range(n_layers):
        din = in_feat if layer == 0 else out_feat
        key, k1, k2, k3, k4 = jax.random.split(key, 5)
        params[f"w_ih_{layer}"] = jax.random.uniform(
            k1, (3 * out_feat, din), jnp.float32, -k, k)
        params[f"w_hh_{layer}"] = jax.random.uniform(
            k2, (3 * out_feat, out_feat), jnp.float32, -k, k)
        params[f"b_ih_{layer}"] = jax.random.uniform(
            k3, (3 * out_feat,), jnp.float32, -k, k)
        params[f"b_hh_{layer}"] = jax.random.uniform(
            k4, (3 * out_feat,), jnp.float32, -k, k)
    key, k5, k6 = jax.random.split(key, 3)
    params["w_lin"] = jax.random.uniform(k5, (1, out_feat), jnp.float32, -k, k)
    params["b_lin"] = jax.random.uniform(k6, (1,), jnp.float32, -k, k)
    return params


# ----------------------------------------------------------------------------
# Pack params for the fused kernel:
#   w_ih_cat (Din, 3H) bf16, w_hh_cat (H, 3H) bf16 (columns [r|z|n]),
#   b_i_cat (1, 3H) f32 with r/z = b_ih+b_hh merged and n = b_ih only,
#   b_hh_n (1, H) f32, w_lin_row (1, H) f32, b_lin (1, 1) f32.
# ----------------------------------------------------------------------------
def pack_params(params, n_layers):
    packed = {}
    for layer in range(n_layers):
        H = params[f"w_hh_{layer}"].shape[-1]
        w_ih = params[f"w_ih_{layer}"]
        w_hh = params[f"w_hh_{layer}"]
        b_ih = params[f"b_ih_{layer}"]
        b_hh = params[f"b_hh_{layer}"]
        packed[f"w_ih_cat_{layer}"] = jnp.transpose(w_ih).astype(jnp.bfloat16)
        packed[f"w_hh_cat_{layer}"] = jnp.transpose(w_hh).astype(jnp.bfloat16)
        b_cat = jnp.concatenate(
            [b_ih[:2 * H] + b_hh[:2 * H], b_ih[2 * H:]]).reshape(1, 3 * H)
        packed[f"b_i_cat_{layer}"] = b_cat.astype(jnp.float32)
        packed[f"b_hh_n_{layer}"] = b_hh[2 * H:].reshape(1, H).astype(jnp.float32)
    packed["w_lin_row"] = params["w_lin"].astype(jnp.float32)        # (1, H)
    packed["b_lin"] = params["b_lin"].reshape(1, 1).astype(jnp.float32)
    return packed


# ----------------------------------------------------------------------------
# Pure-JAX reference (PyTorch nn.GRU math).  matmul_dtype=bfloat16 mirrors the
# kernel's MXU precision (f32 accumulate) for a tight semantic check;
# matmul_dtype=float32 is the exact f32 spec for a looser precision sanity check.
# ----------------------------------------------------------------------------
def rnn_forward_ref(x, params, n_layers, matmul_dtype=jnp.float32):
    S, B, N, F = x.shape
    seq = x.reshape(S, B, N * F).astype(jnp.float32)
    finals = []
    for layer in range(n_layers):
        H = params[f"w_hh_{layer}"].shape[-1]
        w_ih = jnp.transpose(params[f"w_ih_{layer}"]).astype(matmul_dtype)  # (Din, 3H)
        w_hh = jnp.transpose(params[f"w_hh_{layer}"]).astype(matmul_dtype)  # (H, 3H)
        b_ih = params[f"b_ih_{layer}"]
        b_hh = params[f"b_hh_{layer}"]

        def step(h, x_t, w_ih=w_ih, w_hh=w_hh, b_ih=b_ih, b_hh=b_hh, H=H):
            gi = jnp.dot(x_t.astype(matmul_dtype), w_ih,
                         preferred_element_type=jnp.float32) + b_ih
            gh = jnp.dot(h.astype(matmul_dtype), w_hh,
                         preferred_element_type=jnp.float32) + b_hh
            r = jax.nn.sigmoid(gi[:, 0:H] + gh[:, 0:H])
            z = jax.nn.sigmoid(gi[:, H:2 * H] + gh[:, H:2 * H])
            n = jnp.tanh(gi[:, 2 * H:3 * H] + r * gh[:, 2 * H:3 * H])
            h_new = (1.0 - z) * n + z * h
            return h_new, h_new

        h0 = jnp.zeros((B, H), jnp.float32)
        h_last, seq = jax.lax.scan(step, h0, seq)
        finals.append(h_last)
    hn = jnp.stack(finals, axis=0)
    out = seq @ jnp.transpose(params["w_lin"]) + params["b_lin"]
    return out, hn


if __name__ == "__main__":
    # Shapes consistent with the module's forward:
    #   x: (seq_len=8, batch=2, num_nodes=4, node_feat=8) -> in_feat = 32
    seq_len, batch, num_nodes, node_feat = 8, 2, 4, 8
    in_feat = num_nodes * node_feat
    out_feat = 32
    n_layers = 2

    key = jax.random.PRNGKey(0)
    key, kx = jax.random.split(key)
    x = jax.random.normal(kx, (seq_len, batch, num_nodes, node_feat), jnp.float32)
    params = init_params(key, in_feat, out_feat, n_layers)
    packed = pack_params(params, n_layers)

    out, hn = rnn_forward(x, packed, n_layers=n_layers)
    out, hn = jax.block_until_ready(out), jax.block_until_ready(hn)

    assert out.shape == (seq_len, batch, 1), out.shape
    assert hn.shape == (n_layers, batch, out_feat), hn.shape

    # Tight semantic check against a reference that uses the same bf16-matmul /
    # f32-accumulate precision as the kernel.
    out_b, hn_b = rnn_forward_ref(x, params, n_layers, matmul_dtype=jnp.bfloat16)
    assert jnp.allclose(out, out_b, atol=5e-3, rtol=5e-3)
    assert jnp.allclose(hn, hn_b, atol=5e-3, rtol=5e-3)

    # Loose precision sanity check against the exact f32 spec.
    out_f, hn_f = rnn_forward_ref(x, params, n_layers, matmul_dtype=jnp.float32)
    assert jnp.allclose(out, out_f, atol=1e-1, rtol=1e-1)
    assert jnp.allclose(hn, hn_f, atol=1e-1, rtol=1e-1)

    print("KERNEL_OK")
</pallas_src>

<mosaic_0001>
module attributes {stable_mosaic.version = 11 : i64} {
  func.func @kernel(%arg0: memref<16x32xbf16, #tpu.memory_space<vmem>>, %arg1: memref<32x96xbf16, #tpu.memory_space<vmem>>, %arg2: memref<32x96xbf16, #tpu.memory_space<vmem>>, %arg3: memref<1x96xf32, #tpu.memory_space<vmem>>, %arg4: memref<1x32xf32, #tpu.memory_space<vmem>>, %arg5: memref<32x96xbf16, #tpu.memory_space<vmem>>, %arg6: memref<32x96xbf16, #tpu.memory_space<vmem>>, %arg7: memref<1x96xf32, #tpu.memory_space<vmem>>, %arg8: memref<1x32xf32, #tpu.memory_space<vmem>>, %arg9: memref<1x32xf32, #tpu.memory_space<vmem>>, %arg10: memref<1x1xf32, #tpu.memory_space<vmem>>, %arg11: memref<16x1xf32, #tpu.memory_space<vmem>>, %arg12: memref<2x2x32xf32, #tpu.memory_space<vmem>>, %arg13: memref<16x32xf32, #tpu.memory_space<vmem>>) attributes {dimension_semantics = [], scalar_prefetch = 0 : i64, scratch_operands = 1 : i64, tpu.core_type = #tpu.core_type<tc>} {
    %c0 = arith.constant 0 : index
    %c0_0 = arith.constant 0 : index
    %0 = vector.load %arg0[%c0, %c0_0] : memref<16x32xbf16, #tpu.memory_space<vmem>>, vector<16x32xbf16>
    %c0_1 = arith.constant 0 : index
    %c0_2 = arith.constant 0 : index
    %1 = vector.load %arg1[%c0_1, %c0_2] : memref<32x96xbf16, #tpu.memory_space<vmem>>, vector<32x96xbf16>
    %cst = arith.constant dense<0.000000e+00> : vector<16x96xf32>
    %2 = tpu.matmul %0, %1, %cst {dimension_numbers = #tpu.dot_dimension_numbers<[1], [0], [0], [1], [0, 0, 1, 1], [], []>} : vector<16x32xbf16>, vector<32x96xbf16>, vector<16x96xf32> -> vector<16x96xf32>
    %c0_3 = arith.constant 0 : index
    %c0_4 = arith.constant 0 : index
    %3 = vector.load %arg3[%c0_3, %c0_4] : memref<1x96xf32, #tpu.memory_space<vmem>>, vector<1x96xf32>
    %4 = vector.broadcast %3 : vector<1x96xf32> to vector<16x96xf32>
    %5 = arith.addf %2, %4 : vector<16x96xf32>
    %c0_5 = arith.constant 0 : index
    %c0_6 = arith.constant 0 : index
    %6 = vector.load %arg2[%c0_5, %c0_6] : memref<32x96xbf16, #tpu.memory_space<vmem>>, vector<32x96xbf16>
    %c0_7 = arith.constant 0 : index
    %c0_8 = arith.constant 0 : index
    %7 = vector.load %arg4[%c0_7, %c0_8] : memref<1x32xf32, #tpu.memory_space<vmem>>, vector<1x32xf32>
    %8 = vector.shape_cast %7 : vector<1x32xf32> to vector<1x32xf32>
    %9 = vector.broadcast %8 : vector<1x32xf32> to vector<2x32xf32>
    %cst_9 = arith.constant 0.000000e+00 : f32
    %10 = vector.broadcast %cst_9 : f32 to vector<2x32xf32>
    %11 = arith.truncf %10 : vector<2x32xf32> to vector<2x32xbf16>
    %cst_10 = arith.constant dense<0.000000e+00> : vector<2x96xf32>
    %12 = tpu.matmul %11, %6, %cst_10 {dimension_numbers = #tpu.dot_dimension_numbers<[1], [0], [0], [1], [0, 0, 1, 1], [], []>} : vector<2x32xbf16>, vector<32x96xbf16>, vector<2x96xf32> -> vector<2x96xf32>
    %13 = vector.extract_strided_slice %5 {offsets = [0, 0], sizes = [2, 32], strides = [1, 1]} : vector<16x96xf32> to vector<2x32xf32>
    %14 = vector.extract_strided_slice %12 {offsets = [0, 0], sizes = [2, 32], strides = [1, 1]} : vector<2x96xf32> to vector<2x32xf32>
    %15 = arith.addf %13, %14 : vector<2x32xf32>
    %16 = arith.negf %15 : vector<2x32xf32>
    %17 = math.exp %16 : vector<2x32xf32>
    %cst_11 = arith.constant 1.000000e+00 : f32
    %18 = vector.broadcast %cst_11 : f32 to vector<2x32xf32>
    %19 = arith.addf %18, %17 : vector<2x32xf32>
    %20 = arith.divf %18, %19 : vector<2x32xf32>
    %21 = vector.extract_strided_slice %5 {offsets = [0, 32], sizes = [2, 32], strides = [1, 1]} : vector<16x96xf32> to vector<2x32xf32>
    %22 = vector.extract_strided_slice %12 {offsets = [0, 32], sizes = [2, 32], strides = [1, 1]} : vector<2x96xf32> to vector<2x32xf32>
    %23 = arith.addf %21, %22 : vector<2x32xf32>
    %24 = arith.negf %23 : vector<2x32xf32>
    %25 = math.exp %24 : vector<2x32xf32>
    %cst_12 = arith.constant 1.000000e+00 : f32
    %26 = vector.broadcast %cst_12 : f32 to vector<2x32xf32>
    %27 = arith.addf %26, %25 : vector<2x32xf32>
    %28 = arith.divf %26, %27 : vector<2x32xf32>
    %29 = vector.extract_strided_slice %5 {offsets = [0, 64], sizes = [2, 32], strides = [1, 1]} : vector<16x96xf32> to vector<2x32xf32>
    %30 = vector.extract_strided_slice %12 {offsets = [0, 64], sizes = [2, 32], strides = [1, 1]} : vector<2x96xf32> to vector<2x32xf32>
    %31 = arith.addf %30, %9 : vector<2x32xf32>
    %32 = arith.mulf %20, %31 : vector<2x32xf32>
    %33 = arith.addf %29, %32 : vector<2x32xf32>
    %34 = math.tanh %33 : vector<2x32xf32>
    %cst_13 = arith.constant 1.000000e+00 : f32
    %35 = vector.broadcast %cst_13 : f32 to vector<2x32xf32>
    %36 = arith.subf %35, %28 : vector<2x32xf32>
    %37 = arith.mulf %36, %34 : vector<2x32xf32>
    %38 = arith.mulf %28, %10 : vector<2x32xf32>
    %39 = arith.addf %37, %38 : vector<2x32xf32>
    %c0_14 = arith.constant 0 : index
    %c0_15 = arith.constant 0 : index
    %40 = vector.load %arg13[%c0_14, %c0_15] : memref<16x32xf32, #tpu.memory_space<vmem>>, vector<2x32xf32>
    tpu.vector_store %arg13[%c0_14, %c0_15], %39 {strides = array<i32>} : memref<16x32xf32, #tpu.memory_space<vmem>>, vector<2x32xf32>,
    %41 = arith.truncf %39 : vector<2x32xf32> to vector<2x32xbf16>
    %cst_16 = arith.constant dense<0.000000e+00> : vector<2x96xf32>
    %42 = tpu.matmul %41, %6, %cst_16 {dimension_numbers = #tpu.dot_dimension_numbers<[1], [0], [0], [1], [0, 0, 1, 1], [], []>} : vector<2x32xbf16>, vector<32x96xbf16>, vector<2x96xf32> -> vector<2x96xf32>
    %43 = vector.extract_strided_slice %5 {offsets = [2, 0], sizes = [2, 32], strides = [1, 1]} : vector<16x96xf32> to vector<2x32xf32>
    %44 = vector.extract_strided_slice %42 {offsets = [0, 0], sizes = [2, 32], strides = [1, 1]} : vector<2x96xf32> to vector<2x32xf32>
    %45 = arith.addf %43, %44 : vector<2x32xf32>
    %46 = arith.negf %45 : vector<2x32xf32>
    %47 = math.exp %46 : vector<2x32xf32>
    %cst_17 = arith.constant 1.000000e+00 : f32
    %48 = vector.broadcast %cst_17 : f32 to vector<2x32xf32>
    %49 = arith.addf %48, %47 : vector<2x32xf32>
    %50 = arith.divf %48, %49 : vector<2x32xf32>
    %51 = vector.extract_strided_slice %5 {offsets = [2, 32], sizes = [2, 32], strides = [1, 1]} : vector<16x96xf32> to vector<2x32xf32>
    %52 = vector.extract_strided_slice %42 {offsets = [0, 32], sizes = [2, 32], strides = [1, 1]} : vector<2x96xf32> to vector<2x32xf32>
    %53 = arith.addf %51, %52 : vector<2x32xf32>
    %54 = arith.negf %53 : vector<2x32xf32>
    %55 = math.exp %54 : vector<2x32xf32>
    %cst_18 = arith.constant 1.000000e+00 : f32
    %56 = vector.broadcast %cst_18 : f32 to vector<2x32xf32>
    %57 = arith.addf %56, %55 : vector<2x32xf32>
    %58 = arith.divf %56, %57 : vector<2x32xf32>
    %59 = vector.extract_strided_slice %5 {offsets = [2, 64], sizes = [2, 32], strides = [1, 1]} : vector<16x96xf32> to vector<2x32xf32>
    %60 = vector.extract_strided_slice %42 {offsets = [0, 64], sizes = [2, 32], strides = [1, 1]} : vector<2x96xf32> to vector<2x32xf32>
    %61 = arith.addf %60, %9 : vector<2x32xf32>
    %62 = arith.mulf %50, %61 : vector<2x32xf32>
    %63 = arith.addf %59, %62 : vector<2x32xf32>
    %64 = math.tanh %63 : vector<2x32xf32>
    %cst_19 = arith.constant 1.000000e+00 : f32
    %65 = vector.broadcast %cst_19 : f32 to vector<2x32xf32>
    %66 = arith.subf %65, %58 : vector<2x32xf32>
    %67 = arith.mulf %66, %64 : vector<2x32xf32>
    %68 = arith.mulf %58, %39 : vector<2x32xf32>
    %69 = arith.addf %67, %68 : vector<2x32xf32>
    %c2 = arith.constant 2 : index
    %c0_20 = arith.constant 0 : index
    %70 = vector.load %arg13[%c2, %c0_20] : memref<16x32xf32, #tpu.memory_space<vmem>>, vector<2x32xf32>
    tpu.vector_store %arg13[%c2, %c0_20], %69 {strides = array<i32>} : memref<16x32xf32, #tpu.memory_space<vmem>>, vector<2x32xf32>,
    %71 = arith.truncf %69 : vector<2x32xf32> to vector<2x32xbf16>
    %cst_21 = arith.constant dense<0.000000e+00> : vector<2x96xf32>
    %72 = tpu.matmul %71, %6, %cst_21 {dimension_numbers = #tpu.dot_dimension_numbers<[1], [0], [0], [1], [0, 0, 1, 1], [], []>} : vector<2x32xbf16>, vector<32x96xbf16>, vector<2x96xf32> -> vector<2x96xf32>
    %73 = vector.extract_strided_slice %5 {offsets = [4, 0], sizes = [2, 32], strides = [1, 1]} : vector<16x96xf32> to vector<2x32xf32>
    %74 = vector.extract_strided_slice %72 {offsets = [0, 0], sizes = [2, 32], strides = [1, 1]} : vector<2x96xf32> to vector<2x32xf32>
    %75 = arith.addf %73, %74 : vector<2x32xf32>
    %76 = arith.negf %75 : vector<2x32xf32>
    %77 = math.exp %76 : vector<2x32xf32>
    %cst_22 = arith.constant 1.000000e+00 : f32
    %78 = vector.broadcast %cst_22 : f32 to vector<2x32xf32>
    %79 = arith.addf %78, %77 : vector<2x32xf32>
    %80 = arith.divf %78, %79 : vector<2x32xf32>
    %81 = vector.extract_strided_slice %5 {offsets = [4, 32], sizes = [2, 32], strides = [1, 1]} : vector<16x96xf32> to vector<2x32xf32>
    %82 = vector.extract_strided_slice %72 {offsets = [0, 32], sizes = [2, 32], strides = [1, 1]} : vector<2x96xf32> to vector<2x32xf32>
    %83 = arith.addf %81, %82 : vector<2x32xf32>
    %84 = arith.negf %83 : vector<2x32xf32>
    %85 = math.exp %84 : vector<2x32xf32>
    %cst_23 = arith.constant 1.000000e+00 : f32
    %86 = vector.broadcast %cst_23 : f32 to vector<2x32xf32>
    %87 = arith.addf %86, %85 : vector<2x32xf32>
    %88 = arith.divf %86, %87 : vector<2x32xf32>
    %89 = vector.extract_strided_slice %5 {offsets = [4, 64], sizes = [2, 32], strides = [1, 1]} : vector<16x96xf32> to vector<2x32xf32>
    %90 = vector.extract_strided_slice %72 {offsets = [0, 64], sizes = [2, 32], strides = [1, 1]} : vector<2x96xf32> to vector<2x32xf32>
    %91 = arith.addf %90, %9 : vector<2x32xf32>
    %92 = arith.mulf %80, %91 : vector<2x32xf32>
    %93 = arith.addf %89, %92 : vector<2x32xf32>
    %94 = math.tanh %93 : vector<2x32xf32>
    %cst_24 = arith.constant 1.000000e+00 : f32
    %95 = vector.broadcast %cst_24 : f32 to vector<2x32xf32>
    %96 = arith.subf %95, %88 : vector<2x32xf32>
    %97 = arith.mulf %96, %94 : vector<2x32xf32>
    %98 = arith.mulf %88, %69 : vector<2x32xf32>
    %99 = arith.addf %97, %98 : vector<2x32xf32>
    %c4 = arith.constant 4 : index
    %c0_25 = arith.constant 0 : index
    %100 = vector.load %arg13[%c4, %c0_25] : memref<16x32xf32, #tpu.memory_space<vmem>>, vector<2x32xf32>
    tpu.vector_store %arg13[%c4, %c0_25], %99 {strides = array<i32>} : memref<16x32xf32, #tpu.memory_space<vmem>>, vector<2x32xf32>,
    %101 = arith.truncf %99 : vector<2x32xf32> to vector<2x32xbf16>
    %cst_26 = arith.constant dense<0.000000e+00> : vector<2x96xf32>
    %102 = tpu.matmul %101, %6, %cst_26 {dimension_numbers = #tpu.dot_dimension_numbers<[1], [0], [0], [1], [0, 0, 1, 1], [], []>} : vector<2x32xbf16>, vector<32x96xbf16>, vector<2x96xf32> -> vector<2x96xf32>
    %103 = vector.extract_strided_slice %5 {offsets = [6, 0], sizes = [2, 32], strides = [1, 1]} : vector<16x96xf32> to vector<2x32xf32>
    %104 = vector.extract_strided_slice %102 {offsets = [0, 0], sizes = [2, 32], strides = [1, 1]} : vector<2x96xf32> to vector<2x32xf32>
    %105 = arith.addf %103, %104 : vector<2x32xf32>
    %106 = arith.negf %105 : vector<2x32xf32>
    %107 = math.exp %106 : vector<2x32xf32>
    %cst_27 = arith.constant 1.000000e+00 : f32
    %108 = vector.broadcast %cst_27 : f32 to vector<2x32xf32>
    %109 = arith.addf %108, %107 : vector<2x32xf32>
    %110 = arith.divf %108, %109 : vector<2x32xf32>
    %111 = vector.extract_strided_slice %5 {offsets = [6, 32], sizes = [2, 32], strides = [1, 1]} : vector<16x96xf32> to vector<2x32xf32>
    %112 = vector.extract_strided_slice %102 {offsets = [0, 32], sizes = [2, 32], strides = [1, 1]} : vector<2x96xf32> to vector<2x32xf32>
    %113 = arith.addf %111, %112 : vector<2x32xf32>
    %114 = arith.negf %113 : vector<2x32xf32>
    %115 = math.exp %114 : vector<2x32xf32>
    %cst_28 = arith.constant 1.000000e+00 : f32
    %116 = vector.broadcast %cst_28 : f32 to vector<2x32xf32>
    %117 = arith.addf %116, %115 : vector<2x32xf32>
    %118 = arith.divf %116, %117 : vector<2x32xf32>
    %119 = vector.extract_strided_slice %5 {offsets = [6, 64], sizes = [2, 32], strides = [1, 1]} : vector<16x96xf32> to vector<2x32xf32>
    %120 = vector.extract_strided_slice %102 {offsets = [0, 64], sizes = [2, 32], strides = [1, 1]} : vector<2x96xf32> to vector<2x32xf32>
    %121 = arith.addf %120, %9 : vector<2x32xf32>
    %122 = arith.mulf %110, %121 : vector<2x32xf32>
    %123 = arith.addf %119, %122 : vector<2x32xf32>
    %124 = math.tanh %123 : vector<2x32xf32>
    %cst_29 = arith.constant 1.000000e+00 : f32
    %125 = vector.broadcast %cst_29 : f32 to vector<2x32xf32>
    %126 = arith.subf %125, %118 : vector<2x32xf32>
    %127 = arith.mulf %126, %124 : vector<2x32xf32>
    %128 = arith.mulf %118, %99 : vector<2x32xf32>
    %129 = arith.addf %127, %128 : vector<2x32xf32>
    %c6 = arith.constant 6 : index
    %c0_30 = arith.constant 0 : index
    %130 = vector.load %arg13[%c6, %c0_30] : memref<16x32xf32, #tpu.memory_space<vmem>>, vector<2x32xf32>
    tpu.vector_store %arg13[%c6, %c0_30], %129 {strides = array<i32>} : memref<16x32xf32, #tpu.memory_space<vmem>>, vector<2x32xf32>,
    %131 = arith.truncf %129 : vector<2x32xf32> to vector<2x32xbf16>
    %cst_31 = arith.constant dense<0.000000e+00> : vector<2x96xf32>
    %132 = tpu.matmul %131, %6, %cst_31 {dimension_numbers = #tpu.dot_dimension_numbers<[1], [0], [0], [1], [0, 0, 1, 1], [], []>} : vector<2x32xbf16>, vector<32x96xbf16>, vector<2x96xf32> -> vector<2x96xf32>
    %133 = vector.extract_strided_slice %5 {offsets = [8, 0], sizes = [2, 32], strides = [1, 1]} : vector<16x96xf32> to vector<2x32xf32>
    %134 = vector.extract_strided_slice %132 {offsets = [0, 0], sizes = [2, 32], strides = [1, 1]} : vector<2x96xf32> to vector<2x32xf32>
    %135 = arith.addf %133, %134 : vector<2x32xf32>
    %136 = arith.negf %135 : vector<2x32xf32>
    %137 = math.exp %136 : vector<2x32xf32>
    %cst_32 = arith.constant 1.000000e+00 : f32
    %138 = vector.broadcast %cst_32 : f32 to vector<2x32xf32>
    %139 = arith.addf %138, %137 : vector<2x32xf32>
    %140 = arith.divf %138, %139 : vector<2x32xf32>
    %141 = vector.extract_strided_slice %5 {offsets = [8, 32], sizes = [2, 32], strides = [1, 1]} : vector<16x96xf32> to vector<2x32xf32>
    %142 = vector.extract_strided_slice %132 {offsets = [0, 32], sizes = [2, 32], strides = [1, 1]} : vector<2x96xf32> to vector<2x32xf32>
    %143 = arith.addf %141, %142 : vector<2x32xf32>
    %144 = arith.negf %143 : vector<2x32xf32>
    %145 = math.exp %144 : vector<2x32xf32>
    %cst_33 = arith.constant 1.000000e+00 : f32
    %146 = vector.broadcast %cst_33 : f32 to vector<2x32xf32>
    %147 = arith.addf %146, %145 : vector<2x32xf32>
    %148 = arith.divf %146, %147 : vector<2x32xf32>
    %149 = vector.extract_strided_slice %5 {offsets = [8, 64], sizes = [2, 32], strides = [1, 1]} : vector<16x96xf32> to vector<2x32xf32>
    %150 = vector.extract_strided_slice %132 {offsets = [0, 64], sizes = [2, 32], strides = [1, 1]} : vector<2x96xf32> to vector<2x32xf32>
    %151 = arith.addf %150, %9 : vector<2x32xf32>
    %152 = arith.mulf %140, %151 : vector<2x32xf32>
    %153 = arith.addf %149, %152 : vector<2x32xf32>
    %154 = math.tanh %153 : vector<2x32xf32>
    %cst_34 = arith.constant 1.000000e+00 : f32
    %155 = vector.broadcast %cst_34 : f32 to vector<2x32xf32>
    %156 = arith.subf %155, %148 : vector<2x32xf32>
    %157 = arith.mulf %156, %154 : vector<2x32xf32>
    %158 = arith.mulf %148, %129 : vector<2x32xf32>
    %159 = arith.addf %157, %158 : vector<2x32xf32>
    %c8 = arith.constant 8 : index
    %c0_35 = arith.constant 0 : index
    %160 = vector.load %arg13[%c8, %c0_35] : memref<16x32xf32, #tpu.memory_space<vmem>>, vector<2x32xf32>
    tpu.vector_store %arg13[%c8, %c0_35], %159 {strides = array<i32>} : memref<16x32xf32, #tpu.memory_space<vmem>>, vector<2x32xf32>,
    %161 = arith.truncf %159 : vector<2x32xf32> to vector<2x32xbf16>
    %cst_36 = arith.constant dense<0.000000e+00> : vector<2x96xf32>
    %162 = tpu.matmul %161, %6, %cst_36 {dimension_numbers = #tpu.dot_dimension_numbers<[1], [0], [0], [1], [0, 0, 1, 1], [], []>} : vector<2x32xbf16>, vector<32x96xbf16>, vector<2x96xf32> -> vector<2x96xf32>
    %163 = vector.extract_strided_slice %5 {offsets = [10, 0], sizes = [2, 32], strides = [1, 1]} : vector<16x96xf32> to vector<2x32xf32>
    %164 = vector.extract_strided_slice %162 {offsets = [0, 0], sizes = [2, 32], strides = [1, 1]} : vector<2x96xf32> to vector<2x32xf32>
    %165 = arith.addf %163, %164 : vector<2x32xf32>
    %166 = arith.negf %165 : vector<2x32xf32>
    %167 = math.exp %166 : vector<2x32xf32>
    %cst_37 = arith.constant 1.000000e+00 : f32
    %168 = vector.broadcast %cst_37 : f32 to vector<2x32xf32>
    %169 = arith.addf %168, %167 : vector<2x32xf32>
    %170 = arith.divf %168, %169 : vector<2x32xf32>
    %171 = vector.extract_strided_slice %5 {offsets = [10, 32], sizes = [2, 32], strides = [1, 1]} : vector<16x96xf32> to vector<2x32xf32>
    %172 = vector.extract_strided_slice %162 {offsets = [0, 32], sizes = [2, 32], strides = [1, 1]} : vector<2x96xf32> to vector<2x32xf32>
    %173 = arith.addf %171, %172 : vector<2x32xf32>
    %174 = arith.negf %173 : vector<2x32xf32>
    %175 = math.exp %174 : vector<2x32xf32>
    %cst_38 = arith.constant 1.000000e+00 : f32
    %176 = vector.broadcast %cst_38 : f32 to vector<2x32xf32>
    %177 = arith.addf %176, %175 : vector<2x32xf32>
    %178 = arith.divf %176, %177 : vector<2x32xf32>
    %179 = vector.extract_strided_slice %5 {offsets = [10, 64], sizes = [2, 32], strides = [1, 1]} : vector<16x96xf32> to vector<2x32xf32>
    %180 = vector.extract_strided_slice %162 {offsets = [0, 64], sizes = [2, 32], strides = [1, 1]} : vector<2x96xf32> to vector<2x32xf32>
    %181 = arith.addf %180, %9 : vector<2x32xf32>
    %182 = arith.mulf %170, %181 : vector<2x32xf32>
    %183 = arith.addf %179, %182 : vector<2x32xf32>
    %184 = math.tanh %183 : vector<2x32xf32>
    %cst_39 = arith.constant 1.000000e+00 : f32
    %185 = vector.broadcast %cst_39 : f32 to vector<2x32xf32>
    %186 = arith.subf %185, %178 : vector<2x32xf32>
    %187 = arith.mulf %186, %184 : vector<2x32xf32>
    %188 = arith.mulf %178, %159 : vector<2x32xf32>
    %189 = arith.addf %187, %188 : vector<2x32xf32>
    %c10 = arith.constant 10 : index
    %c0_40 = arith.constant 0 : index
    %190 = vector.load %arg13[%c10, %c0_40] : memref<16x32xf32, #tpu.memory_space<vmem>>, vector<2x32xf32>
    tpu.vector_store %arg13[%c10, %c0_40], %189 {strides = array<i32>} : memref<16x32xf32, #tpu.memory_space<vmem>>, vector<2x32xf32>,
    %191 = arith.truncf %189 : vector<2x32xf32> to vector<2x32xbf16>
    %cst_41 = arith.constant dense<0.000000e+00> : vector<2x96xf32>
    %192 = tpu.matmul %191, %6, %cst_41 {dimension_numbers = #tpu.dot_dimension_numbers<[1], [0], [0], [1], [0, 0, 1, 1], [], []>} : vector<2x32xbf16>, vector<32x96xbf16>, vector<2x96xf32> -> vector<2x96xf32>
    %193 = vector.extract_strided_slice %5 {offsets = [12, 0], sizes = [2, 32], strides = [1, 1]} : vector<16x96xf32> to vector<2x32xf32>
    %194 = vector.extract_strided_slice %192 {offsets = [0, 0], sizes = [2, 32], strides = [1, 1]} : vector<2x96xf32> to vector<2x32xf32>
    %195 = arith.addf %193, %194 : vector<2x32xf32>
    %196 = arith.negf %195 : vector<2x32xf32>
    %197 = math.exp %196 : vector<2x32xf32>
    %cst_42 = arith.constant 1.000000e+00 : f32
    %198 = vector.broadcast %cst_42 : f32 to vector<2x32xf32>
    %199 = arith.addf %198, %197 : vector<2x32xf32>
    %200 = arith.divf %198, %199 : vector<2x32xf32>
    %201 = vector.extract_strided_slice %5 {offsets = [12, 32], sizes = [2, 32], strides = [1, 1]} : vector<16x96xf32> to vector<2x32xf32>
    %202 = vector.extract_strided_slice %192 {offsets = [0, 32], sizes = [2, 32], strides = [1, 1]} : vector<2x96xf32> to vector<2x32xf32>
    %203 = arith.addf %201, %202 : vector<2x32xf32>
    %204 = arith.negf %203 : vector<2x32xf32>
    %205 = math.exp %204 : vector<2x32xf32>
    %cst_43 = arith.constant 1.000000e+00 : f32
    %206 = vector.broadcast %cst_43 : f32 to vector<2x32xf32>
    %207 = arith.addf %206, %205 : vector<2x32xf32>
    %208 = arith.divf %206, %207 : vector<2x32xf32>
    %209 = vector.extract_strided_slice %5 {offsets = [12, 64], sizes = [2, 32], strides = [1, 1]} : vector<16x96xf32> to vector<2x32xf32>
    %210 = vector.extract_strided_slice %192 {offsets = [0, 64], sizes = [2, 32], strides = [1, 1]} : vector<2x96xf32> to vector<2x32xf32>
    %211 = arith.addf %210, %9 : vector<2x32xf32>
    %212 = arith.mulf %200, %211 : vector<2x32xf32>
    %213 = arith.addf %209, %212 : vector<2x32xf32>
    %214 = math.tanh %213 : vector<2x32xf32>
    %cst_44 = arith.constant 1.000000e+00 : f32
    %215 = vector.broadcast %cst_44 : f32 to vector<2x32xf32>
    %216 = arith.subf %215, %208 : vector<2x32xf32>
    %217 = arith.mulf %216, %214 : vector<2x32xf32>
    %218 = arith.mulf %208, %189 : vector<2x32xf32>
    %219 = arith.addf %217, %218 : vector<2x32xf32>
    %c12 = arith.constant 12 : index
    %c0_45 = arith.constant 0 : index
    %220 = vector.load %arg13[%c12, %c0_45] : memref<16x32xf32, #tpu.memory_space<vmem>>, vector<2x32xf32>
    tpu.vector_store %arg13[%c12, %c0_45], %219 {strides = array<i32>} : memref<16x32xf32, #tpu.memory_space<vmem>>, vector<2x32xf32>,
    %221 = arith.truncf %219 : vector<2x32xf32> to vector<2x32xbf16>
    %cst_46 = arith.constant dense<0.000000e+00> : vector<2x96xf32>
    %222 = tpu.matmul %221, %6, %cst_46 {dimension_numbers = #tpu.dot_dimension_numbers<[1], [0], [0], [1], [0, 0, 1, 1], [], []>} : vector<2x32xbf16>, vector<32x96xbf16>, vector<2x96xf32> -> vector<2x96xf32>
    %223 = vector.extract_strided_slice %5 {offsets = [14, 0], sizes = [2, 32], strides = [1, 1]} : vector<16x96xf32> to vector<2x32xf32>
    %224 = vector.extract_strided_slice %222 {offsets = [0, 0], sizes = [2, 32], strides = [1, 1]} : vector<2x96xf32> to vector<2x32xf32>
    %225 = arith.addf %223, %224 : vector<2x32xf32>
    %226 = arith.negf %225 : vector<2x32xf32>
    %227 = math.exp %226 : vector<2x32xf32>
    %cst_47 = arith.constant 1.000000e+00 : f32
    %228 = vector.broadcast %cst_47 : f32 to vector<2x32xf32>
    %229 = arith.addf %228, %227 : vector<2x32xf32>
    %230 = arith.divf %228, %229 : vector<2x32xf32>
    %231 = vector.extract_strided_slice %5 {offsets = [14, 32], sizes = [2, 32], strides = [1, 1]} : vector<16x96xf32> to vector<2x32xf32>
    %232 = vector.extract_strided_slice %222 {offsets = [0, 32], sizes = [2, 32], strides = [1, 1]} : vector<2x96xf32> to vector<2x32xf32>
    %233 = arith.addf %231, %232 : vector<2x32xf32>
    %234 = arith.negf %233 : vector<2x32xf32>
    %235 = math.exp %234 : vector<2x32xf32>
    %cst_48 = arith.constant 1.000000e+00 : f32
    %236 = vector.broadcast %cst_48 : f32 to vector<2x32xf32>
    %237 = arith.addf %236, %235 : vector<2x32xf32>
    %238 = arith.divf %236, %237 : vector<2x32xf32>
    %239 = vector.extract_strided_slice %5 {offsets = [14, 64], sizes = [2, 32], strides = [1, 1]} : vector<16x96xf32> to vector<2x32xf32>
    %240 = vector.extract_strided_slice %222 {offsets = [0, 64], sizes = [2, 32], strides = [1, 1]} : vector<2x96xf32> to vector<2x32xf32>
    %241 = arith.addf %240, %9 : vector<2x32xf32>
    %242 = arith.mulf %230, %241 : vector<2x32xf32>
    %243 = arith.addf %239, %242 : vector<2x32xf32>
    %244 = math.tanh %243 : vector<2x32xf32>
    %cst_49 = arith.constant 1.000000e+00 : f32
    %245 = vector.broadcast %cst_49 : f32 to vector<2x32xf32>
    %246 = arith.subf %245, %238 : vector<2x32xf32>
    %247 = arith.mulf %246, %244 : vector<2x32xf32>
    %248 = arith.mulf %238, %219 : vector<2x32xf32>
    %249 = arith.addf %247, %248 : vector<2x32xf32>
    %c14 = arith.constant 14 : index
    %c0_50 = arith.constant 0 : index
    %250 = vector.load %arg13[%c14, %c0_50] : memref<16x32xf32, #tpu.memory_space<vmem>>, vector<2x32xf32>
    tpu.vector_store %arg13[%c14, %c0_50], %249 {strides = array<i32>} : memref<16x32xf32, #tpu.memory_space<vmem>>, vector<2x32xf32>,
    %c0_51 = arith.constant 0 : index
    %c0_52 = arith.constant 0 : index
    %c0_53 = arith.constant 0 : index
    %251 = vector.load %arg12[%c0_51, %c0_52, %c0_53] : memref<2x2x32xf32, #tpu.memory_space<vmem>>, vector<1x2x32xf32>
    %252 = vector.shape_cast %251 : vector<1x2x32xf32> to vector<2x32xf32>
    %253 = vector.shape_cast %249 : vector<2x32xf32> to vector<1x2x32xf32>
    tpu.vector_store %arg12[%c0_51, %c0_52, %c0_53], %253 {strides = array<i32>} : memref<2x2x32xf32, #tpu.memory_space<vmem>>, vector<1x2x32xf32>,
    %c0_54 = arith.constant 0 : index
    %c0_55 = arith.constant 0 : index
    %254 = vector.load %arg13[%c0_54, %c0_55] : memref<16x32xf32, #tpu.memory_space<vmem>>, vector<16x32xf32>
    %255 = arith.truncf %254 : vector<16x32xf32> to vector<16x32xbf16>
    %c0_56 = arith.constant 0 : index
    %c0_57 = arith.constant 0 : index
    %256 = vector.load %arg5[%c0_56, %c0_57] : memref<32x96xbf16, #tpu.memory_space<vmem>>, vector<32x96xbf16>
    %cst_58 = arith.constant dense<0.000000e+00> : vector<16x96xf32>
    %257 = tpu.matmul %255, %256, %cst_58 {dimension_numbers = #tpu.dot_dimension_numbers<[1], [0], [0], [1], [0, 0, 1, 1], [], []>} : vector<16x32xbf16>, vector<32x96xbf16>, vector<16x96xf32> -> vector<16x96xf32>
    %c0_59 = arith.constant 0 : index
    %c0_60 = arith.constant 0 : index
    %258 = vector.load %arg7[%c0_59, %c0_60] : memref<1x96xf32, #tpu.memory_space<vmem>>, vector<1x96xf32>
    %259 = vector.broadcast %258 : vector<1x96xf32> to vector<16x96xf32>
    %260 = arith.addf %257, %259 : vector<16x96xf32>
    %c0_61 = arith.constant 0 : index
    %c0_62 = arith.constant 0 : index
    %261 = vector.load %arg6[%c0_61, %c0_62] : memref<32x96xbf16, #tpu.memory_space<vmem>>, vector<32x96xbf16>
    %c0_63 = arith.constant 0 : index
    %c0_64 = arith.constant 0 : index
    %262 = vector.load %arg8[%c0_63, %c0_64] : memref<1x32xf32, #tpu.memory_space<vmem>>, vector<1x32xf32>
    %263 = vector.shape_cast %262 : vector<1x32xf32> to vector<1x32xf32>
    %264 = vector.broadcast %263 : vector<1x32xf32> to vector<2x32xf32>
    %cst_65 = arith.constant 0.000000e+00 : f32
    %265 = vector.broadcast %cst_65 : f32 to vector<2x32xf32>
    %266 = arith.truncf %265 : vector<2x32xf32> to vector<2x32xbf16>
    %cst_66 = arith.constant dense<0.000000e+00> : vector<2x96xf32>
    %267 = tpu.matmul %266, %261, %cst_66 {dimension_numbers = #tpu.dot_dimension_numbers<[1], [0], [0], [1], [0, 0, 1, 1], [], []>} : vector<2x32xbf16>, vector<32x96xbf16>, vector<2x96xf32> -> vector<2x96xf32>
    %268 = vector.extract_strided_slice %260 {offsets = [0, 0], sizes = [2, 32], strides = [1, 1]} : vector<16x96xf32> to vector<2x32xf32>
    %269 = vector.extract_strided_slice %267 {offsets = [0, 0], sizes = [2, 32], strides = [1, 1]} : vector<2x96xf32> to vector<2x32xf32>
    %270 = arith.addf %268, %269 : vector<2x32xf32>
    %271 = arith.negf %270 : vector<2x32xf32>
    %272 = math.exp %271 : vector<2x32xf32>
    %cst_67 = arith.constant 1.000000e+00 : f32
    %273 = vector.broadcast %cst_67 : f32 to vector<2x32xf32>
    %274 = arith.addf %273, %272 : vector<2x32xf32>
    %275 = arith.divf %273, %274 : vector<2x32xf32>
    %276 = vector.extract_strided_slice %260 {offsets = [0, 32], sizes = [2, 32], strides = [1, 1]} : vector<16x96xf32> to vector<2x32xf32>
    %277 = vector.extract_strided_slice %267 {offsets = [0, 32], sizes = [2, 32], strides = [1, 1]} : vector<2x96xf32> to vector<2x32xf32>
    %278 = arith.addf %276, %277 : vector<2x32xf32>
    %279 = arith.negf %278 : vector<2x32xf32>
    %280 = math.exp %279 : vector<2x32xf32>
    %cst_68 = arith.constant 1.000000e+00 : f32
    %281 = vector.broadcast %cst_68 : f32 to vector<2x32xf32>
    %282 = arith.addf %281, %280 : vector<2x32xf32>
    %283 = arith.divf %281, %282 : vector<2x32xf32>
    %284 = vector.extract_strided_slice %260 {offsets = [0, 64], sizes = [2, 32], strides = [1, 1]} : vector<16x96xf32> to vector<2x32xf32>
    %285 = vector.extract_strided_slice %267 {offsets = [0, 64], sizes = [2, 32], strides = [1, 1]} : vector<2x96xf32> to vector<2x32xf32>
    %286 = arith.addf %285, %264 : vector<2x32xf32>
    %287 = arith.mulf %275, %286 : vector<2x32xf32>
    %288 = arith.addf %284, %287 : vector<2x32xf32>
    %289 = math.tanh %288 : vector<2x32xf32>
    %cst_69 = arith.constant 1.000000e+00 : f32
    %290 = vector.broadcast %cst_69 : f32 to vector<2x32xf32>
    %291 = arith.subf %290, %283 : vector<2x32xf32>
    %292 = arith.mulf %291, %289 : vector<2x32xf32>
    %293 = arith.mulf %283, %265 : vector<2x32xf32>
    %294 = arith.addf %292, %293 : vector<2x32xf32>
    %c0_70 = arith.constant 0 : index
    %c0_71 = arith.constant 0 : index
    %295 = vector.load %arg13[%c0_70, %c0_71] : memref<16x32xf32, #tpu.memory_space<vmem>>, vector<2x32xf32>
    tpu.vector_store %arg13[%c0_70, %c0_71], %294 {strides = array<i32>} : memref<16x32xf32, #tpu.memory_space<vmem>>, vector<2x32xf32>,
    %296 = arith.truncf %294 : vector<2x32xf32> to vector<2x32xbf16>
    %cst_72 = arith.constant dense<0.000000e+00> : vector<2x96xf32>
    %297 = tpu.matmul %296, %261, %cst_72 {dimension_numbers = #tpu.dot_dimension_numbers<[1], [0], [0], [1], [0, 0, 1, 1], [], []>} : vector<2x32xbf16>, vector<32x96xbf16>, vector<2x96xf32> -> vector<2x96xf32>
    %298 = vector.extract_strided_slice %260 {offsets = [2, 0], sizes = [2, 32], strides = [1, 1]} : vector<16x96xf32> to vector<2x32xf32>
    %299 = vector.extract_strided_slice %297 {offsets = [0, 0], sizes = [2, 32], strides = [1, 1]} : vector<2x96xf32> to vector<2x32xf32>
    %300 = arith.addf %298, %299 : vector<2x32xf32>
    %301 = arith.negf %300 : vector<2x32xf32>
    %302 = math.exp %301 : vector<2x32xf32>
    %cst_73 = arith.constant 1.000000e+00 : f32
    %303 = vector.broadcast %cst_73 : f32 to vector<2x32xf32>
    %304 = arith.addf %303, %302 : vector<2x32xf32>
    %305 = arith.divf %303, %304 : vector<2x32xf32>
    %306 = vector.extract_strided_slice %260 {offsets = [2, 32], sizes = [2, 32], strides = [1, 1]} : vector<16x96xf32> to vector<2x32xf32>
    %307 = vector.extract_strided_slice %297 {offsets = [0, 32], sizes = [2, 32], strides = [1, 1]} : vector<2x96xf32> to vector<2x32xf32>
    %308 = arith.addf %306, %307 : vector<2x32xf32>
    %309 = arith.negf %308 : vector<2x32xf32>
    %310 = math.exp %309 : vector<2x32xf32>
    %cst_74 = arith.constant 1.000000e+00 : f32
    %311 = vector.broadcast %cst_74 : f32 to vector<2x32xf32>
    %312 = arith.addf %311, %310 : vector<2x32xf32>
    %313 = arith.divf %311, %312 : vector<2x32xf32>
    %314 = vector.extract_strided_slice %260 {offsets = [2, 64], sizes = [2, 32], strides = [1, 1]} : vector<16x96xf32> to vector<2x32xf32>
    %315 = vector.extract_strided_slice %297 {offsets = [0, 64], sizes = [2, 32], strides = [1, 1]} : vector<2x96xf32> to vector<2x32xf32>
    %316 = arith.addf %315, %264 : vector<2x32xf32>
    %317 = arith.mulf %305, %316 : vector<2x32xf32>
    %318 = arith.addf %314, %317 : vector<2x32xf32>
    %319 = math.tanh %318 : vector<2x32xf32>
    %cst_75 = arith.constant 1.000000e+00 : f32
    %320 = vector.broadcast %cst_75 : f32 to vector<2x32xf32>
    %321 = arith.subf %320, %313 : vector<2x32xf32>
    %322 = arith.mulf %321, %319 : vector<2x32xf32>
    %323 = arith.mulf %313, %294 : vector<2x32xf32>
    %324 = arith.addf %322, %323 : vector<2x32xf32>
    %c2_76 = arith.constant 2 : index
    %c0_77 = arith.constant 0 : index
    %325 = vector.load %arg13[%c2_76, %c0_77] : memref<16x32xf32, #tpu.memory_space<vmem>>, vector<2x32xf32>
    tpu.vector_store %arg13[%c2_76, %c0_77], %324 {strides = array<i32>} : memref<16x32xf32, #tpu.memory_space<vmem>>, vector<2x32xf32>,
    %326 = arith.truncf %324 : vector<2x32xf32> to vector<2x32xbf16>
    %cst_78 = arith.constant dense<0.000000e+00> : vector<2x96xf32>
    %327 = tpu.matmul %326, %261, %cst_78 {dimension_numbers = #tpu.dot_dimension_numbers<[1], [0], [0], [1], [0, 0, 1, 1], [], []>} : vector<2x32xbf16>, vector<32x96xbf16>, vector<2x96xf32> -> vector<2x96xf32>
    %328 = vector.extract_strided_slice %260 {offsets = [4, 0], sizes = [2, 32], strides = [1, 1]} : vector<16x96xf32> to vector<2x32xf32>
    %329 = vector.extract_strided_slice %327 {offsets = [0, 0], sizes = [2, 32], strides = [1, 1]} : vector<2x96xf32> to vector<2x32xf32>
    %330 = arith.addf %328, %329 : vector<2x32xf32>
    %331 = arith.negf %330 : vector<2x32xf32>
    %332 = math.exp %331 : vector<2x32xf32>
    %cst_79 = arith.constant 1.000000e+00 : f32
    %333 = vector.broadcast %cst_79 : f32 to vector<2x32xf32>
    %334 = arith.addf %333, %332 : vector<2x32xf32>
    %335 = arith.divf %333, %334 : vector<2x32xf32>
    %336 = vector.extract_strided_slice %260 {offsets = [4, 32], sizes = [2, 32], strides = [1, 1]} : vector<16x96xf32> to vector<2x32xf32>
    %337 = vector.extract_strided_slice %327 {offsets = [0, 32], sizes = [2, 32], strides = [1, 1]} : vector<2x96xf32> to vector<2x32xf32>
    %338 = arith.addf %336, %337 : vector<2x32xf32>
    %339 = arith.negf %338 : vector<2x32xf32>
    %340 = math.exp %339 : vector<2x32xf32>
    %cst_80 = arith.constant 1.000000e+00 : f32
    %341 = vector.broadcast %cst_80 : f32 to vector<2x32xf32>
    %342 = arith.addf %341, %340 : vector<2x32xf32>
    %343 = arith.divf %341, %342 : vector<2x32xf32>
    %344 = vector.extract_strided_slice %260 {offsets = [4, 64], sizes = [2, 32], strides = [1, 1]} : vector<16x96xf32> to vector<2x32xf32>
    %345 = vector.extract_strided_slice %327 {offsets = [0, 64], sizes = [2, 32], strides = [1, 1]} : vector<2x96xf32> to vector<2x32xf32>
    %346 = arith.addf %345, %264 : vector<2x32xf32>
    %347 = arith.mulf %335, %346 : vector<2x32xf32>
    %348 = arith.addf %344, %347 : vector<2x32xf32>
    %349 = math.tanh %348 : vector<2x32xf32>
    %cst_81 = arith.constant 1.000000e+00 : f32
    %350 = vector.broadcast %cst_81 : f32 to vector<2x32xf32>
    %351 = arith.subf %350, %343 : vector<2x32xf32>
    %352 = arith.mulf %351, %349 : vector<2x32xf32>
    %353 = arith.mulf %343, %324 : vector<2x32xf32>
    %354 = arith.addf %352, %353 : vector<2x32xf32>
    %c4_82 = arith.constant 4 : index
    %c0_83 = arith.constant 0 : index
    %355 = vector.load %arg13[%c4_82, %c0_83] : memref<16x32xf32, #tpu.memory_space<vmem>>, vector<2x32xf32>
    tpu.vector_store %arg13[%c4_82, %c0_83], %354 {strides = array<i32>} : memref<16x32xf32, #tpu.memory_space<vmem>>, vector<2x32xf32>,
    %356 = arith.truncf %354 : vector<2x32xf32> to vector<2x32xbf16>
    %cst_84 = arith.constant dense<0.000000e+00> : vector<2x96xf32>
    %357 = tpu.matmul %356, %261, %cst_84 {dimension_numbers = #tpu.dot_dimension_numbers<[1], [0], [0], [1], [0, 0, 1, 1], [], []>} : vector<2x32xbf16>, vector<32x96xbf16>, vector<2x96xf32> -> vector<2x96xf32>
    %358 = vector.extract_strided_slice %260 {offsets = [6, 0], sizes = [2, 32], strides = [1, 1]} : vector<16x96xf32> to vector<2x32xf32>
    %359 = vector.extract_strided_slice %357 {offsets = [0, 0], sizes = [2, 32], strides = [1, 1]} : vector<2x96xf32> to vector<2x32xf32>
    %360 = arith.addf %358, %359 : vector<2x32xf32>
    %361 = arith.negf %360 : vector<2x32xf32>
    %362 = math.exp %361 : vector<2x32xf32>
    %cst_85 = arith.constant 1.000000e+00 : f32
    %363 = vector.broadcast %cst_85 : f32 to vector<2x32xf32>
    %364 = arith.addf %363, %362 : vector<2x32xf32>
    %365 = arith.divf %363, %364 : vector<2x32xf32>
    %366 = vector.extract_strided_slice %260 {offsets = [6, 32], sizes = [2, 32], strides = [1, 1]} : vector<16x96xf32> to vector<2x32xf32>
    %367 = vector.extract_strided_slice %357 {offsets = [0, 32], sizes = [2, 32], strides = [1, 1]} : vector<2x96xf32> to vector<2x32xf32>
    %368 = arith.addf %366, %367 : vector<2x32xf32>
    %369 = arith.negf %368 : vector<2x32xf32>
    %370 = math.exp %369 : vector<2x32xf32>
    %cst_86 = arith.constant 1.000000e+00 : f32
    %371 = vector.broadcast %cst_86 : f32 to vector<2x32xf32>
    %372 = arith.addf %371, %370 : vector<2x32xf32>
    %373 = arith.divf %371, %372 : vector<2x32xf32>
    %374 = vector.extract_strided_slice %260 {offsets = [6, 64], sizes = [2, 32], strides = [1, 1]} : vector<16x96xf32> to vector<2x32xf32>
    %375 = vector.extract_strided_slice %357 {offsets = [0, 64], sizes = [2, 32], strides = [1, 1]} : vector<2x96xf32> to vector<2x32xf32>
    %376 = arith.addf %375, %264 : vector<2x32xf32>
    %377 = arith.mulf %365, %376 : vector<2x32xf32>
    %378 = arith.addf %374, %377 : vector<2x32xf32>
    %379 = math.tanh %378 : vector<2x32xf32>
    %cst_87 = arith.constant 1.000000e+00 : f32
    %380 = vector.broadcast %cst_87 : f32 to vector<2x32xf32>
    %381 = arith.subf %380, %373 : vector<2x32xf32>
    %382 = arith.mulf %381, %379 : vector<2x32xf32>
    %383 = arith.mulf %373, %354 : vector<2x32xf32>
    %384 = arith.addf %382, %383 : vector<2x32xf32>
    %c6_88 = arith.constant 6 : index
    %c0_89 = arith.constant 0 : index
    %385 = vector.load %arg13[%c6_88, %c0_89] : memref<16x32xf32, #tpu.memory_space<vmem>>, vector<2x32xf32>
    tpu.vector_store %arg13[%c6_88, %c0_89], %384 {strides = array<i32>} : memref<16x32xf32, #tpu.memory_space<vmem>>, vector<2x32xf32>,
    %386 = arith.truncf %384 : vector<2x32xf32> to vector<2x32xbf16>
    %cst_90 = arith.constant dense<0.000000e+00> : vector<2x96xf32>
    %387 = tpu.matmul %386, %261, %cst_90 {dimension_numbers = #tpu.dot_dimension_numbers<[1], [0], [0], [1], [0, 0, 1, 1], [], []>} : vector<2x32xbf16>, vector<32x96xbf16>, vector<2x96xf32> -> vector<2x96xf32>
    %388 = vector.extract_strided_slice %260 {offsets = [8, 0], sizes = [2, 32], strides = [1, 1]} : vector<16x96xf32> to vector<2x32xf32>
    %389 = vector.extract_strided_slice %387 {offsets = [0, 0], sizes = [2, 32], strides = [1, 1]} : vector<2x96xf32> to vector<2x32xf32>
    %390 = arith.addf %388, %389 : vector<2x32xf32>
    %391 = arith.negf %390 : vector<2x32xf32>
    %392 = math.exp %391 : vector<2x32xf32>
    %cst_91 = arith.constant 1.000000e+00 : f32
    %393 = vector.broadcast %cst_91 : f32 to vector<2x32xf32>
    %394 = arith.addf %393, %392 : vector<2x32xf32>
    %395 = arith.divf %393, %394 : vector<2x32xf32>
    %396 = vector.extract_strided_slice %260 {offsets = [8, 32], sizes = [2, 32], strides = [1, 1]} : vector<16x96xf32> to vector<2x32xf32>
    %397 = vector.extract_strided_slice %387 {offsets = [0, 32], sizes = [2, 32], strides = [1, 1]} : vector<2x96xf32> to vector<2x32xf32>
    %398 = arith.addf %396, %397 : vector<2x32xf32>
    %399 = arith.negf %398 : vector<2x32xf32>
    %400 = math.exp %399 : vector<2x32xf32>
    %cst_92 = arith.constant 1.000000e+00 : f32
    %401 = vector.broadcast %cst_92 : f32 to vector<2x32xf32>
    %402 = arith.addf %401, %400 : vector<2x32xf32>
    %403 = arith.divf %401, %402 : vector<2x32xf32>
    %404 = vector.extract_strided_slice %260 {offsets = [8, 64], sizes = [2, 32], strides = [1, 1]} : vector<16x96xf32> to vector<2x32xf32>
    %405 = vector.extract_strided_slice %387 {offsets = [0, 64], sizes = [2, 32], strides = [1, 1]} : vector<2x96xf32> to vector<2x32xf32>
    %406 = arith.addf %405, %264 : vector<2x32xf32>
    %407 = arith.mulf %395, %406 : vector<2x32xf32>
    %408 = arith.addf %404, %407 : vector<2x32xf32>
    %409 = math.tanh %408 : vector<2x32xf32>
    %cst_93 = arith.constant 1.000000e+00 : f32
    %410 = vector.broadcast %cst_93 : f32 to vector<2x32xf32>
    %411 = arith.subf %410, %403 : vector<2x32xf32>
    %412 = arith.mulf %411, %409 : vector<2x32xf32>
    %413 = arith.mulf %403, %384 : vector<2x32xf32>
    %414 = arith.addf %412, %413 : vector<2x32xf32>
    %c8_94 = arith.constant 8 : index
    %c0_95 = arith.constant 0 : index
    %415 = vector.load %arg13[%c8_94, %c0_95] : memref<16x32xf32, #tpu.memory_space<vmem>>, vector<2x32xf32>
    tpu.vector_store %arg13[%c8_94, %c0_95], %414 {strides = array<i32>} : memref<16x32xf32, #tpu.memory_space<vmem>>, vector<2x32xf32>,
    %416 = arith.truncf %414 : vector<2x32xf32> to vector<2x32xbf16>
    %cst_96 = arith.constant dense<0.000000e+00> : vector<2x96xf32>
    %417 = tpu.matmul %416, %261, %cst_96 {dimension_numbers = #tpu.dot_dimension_numbers<[1], [0], [0], [1], [0, 0, 1, 1], [], []>} : vector<2x32xbf16>, vector<32x96xbf16>, vector<2x96xf32> -> vector<2x96xf32>
    %418 = vector.extract_strided_slice %260 {offsets = [10, 0], sizes = [2, 32], strides = [1, 1]} : vector<16x96xf32> to vector<2x32xf32>
    %419 = vector.extract_strided_slice %417 {offsets = [0, 0], sizes = [2, 32], strides = [1, 1]} : vector<2x96xf32> to vector<2x32xf32>
    %420 = arith.addf %418, %419 : vector<2x32xf32>
    %421 = arith.negf %420 : vector<2x32xf32>
    %422 = math.exp %421 : vector<2x32xf32>
    %cst_97 = arith.constant 1.000000e+00 : f32
    %423 = vector.broadcast %cst_97 : f32 to vector<2x32xf32>
    %424 = arith.addf %423, %422 : vector<2x32xf32>
    %425 = arith.divf %423, %424 : vector<2x32xf32>
    %426 = vector.extract_strided_slice %260 {offsets = [10, 32], sizes = [2, 32], strides = [1, 1]} : vector<16x96xf32> to vector<2x32xf32>
    %427 = vector.extract_strided_slice %417 {offsets = [0, 32], sizes = [2, 32], strides = [1, 1]} : vector<2x96xf32> to vector<2x32xf32>
    %428 = arith.addf %426, %427 : vector<2x32xf32>
    %429 = arith.negf %428 : vector<2x32xf32>
    %430 = math.exp %429 : vector<2x32xf32>
    %cst_98 = arith.constant 1.000000e+00 : f32
    %431 = vector.broadcast %cst_98 : f32 to vector<2x32xf32>
    %432 = arith.addf %431, %430 : vector<2x32xf32>
    %433 = arith.divf %431, %432 : vector<2x32xf32>
    %434 = vector.extract_strided_slice %260 {offsets = [10, 64], sizes = [2, 32], strides = [1, 1]} : vector<16x96xf32> to vector<2x32xf32>
    %435 = vector.extract_strided_slice %417 {offsets = [0, 64], sizes = [2, 32], strides = [1, 1]} : vector<2x96xf32> to vector<2x32xf32>
    %436 = arith.addf %435, %264 : vector<2x32xf32>
    %437 = arith.mulf %425, %436 : vector<2x32xf32>
    %438 = arith.addf %434, %437 : vector<2x32xf32>
    %439 = math.tanh %438 : vector<2x32xf32>
    %cst_99 = arith.constant 1.000000e+00 : f32
    %440 = vector.broadcast %cst_99 : f32 to vector<2x32xf32>
    %441 = arith.subf %440, %433 : vector<2x32xf32>
    %442 = arith.mulf %441, %439 : vector<2x32xf32>
    %443 = arith.mulf %433, %414 : vector<2x32xf32>
    %444 = arith.addf %442, %443 : vector<2x32xf32>
    %c10_100 = arith.constant 10 : index
    %c0_101 = arith.constant 0 : index
    %445 = vector.load %arg13[%c10_100, %c0_101] : memref<16x32xf32, #tpu.memory_space<vmem>>, vector<2x32xf32>
    tpu.vector_store %arg13[%c10_100, %c0_101], %444 {strides = array<i32>} : memref<16x32xf32, #tpu.memory_space<vmem>>, vector<2x32xf32>,
    %446 = arith.truncf %444 : vector<2x32xf32> to vector<2x32xbf16>
    %cst_102 = arith.constant dense<0.000000e+00> : vector<2x96xf32>
    %447 = tpu.matmul %446, %261, %cst_102 {dimension_numbers = #tpu.dot_dimension_numbers<[1], [0], [0], [1], [0, 0, 1, 1], [], []>} : vector<2x32xbf16>, vector<32x96xbf16>, vector<2x96xf32> -> vector<2x96xf32>
    %448 = vector.extract_strided_slice %260 {offsets = [12, 0], sizes = [2, 32], strides = [1, 1]} : vector<16x96xf32> to vector<2x32xf32>
    %449 = vector.extract_strided_slice %447 {offsets = [0, 0], sizes = [2, 32], strides = [1, 1]} : vector<2x96xf32> to vector<2x32xf32>
    %450 = arith.addf %448, %449 : vector<2x32xf32>
    %451 = arith.negf %450 : vector<2x32xf32>
    %452 = math.exp %451 : vector<2x32xf32>
    %cst_103 = arith.constant 1.000000e+00 : f32
    %453 = vector.broadcast %cst_103 : f32 to vector<2x32xf32>
    %454 = arith.addf %453, %452 : vector<2x32xf32>
    %455 = arith.divf %453, %454 : vector<2x32xf32>
    %456 = vector.extract_strided_slice %260 {offsets = [12, 32], sizes = [2, 32], strides = [1, 1]} : vector<16x96xf32> to vector<2x32xf32>
    %457 = vector.extract_strided_slice %447 {offsets = [0, 32], sizes = [2, 32], strides = [1, 1]} : vector<2x96xf32> to vector<2x32xf32>
    %458 = arith.addf %456, %457 : vector<2x32xf32>
    %459 = arith.negf %458 : vector<2x32xf32>
    %460 = math.exp %459 : vector<2x32xf32>
    %cst_104 = arith.constant 1.000000e+00 : f32
    %461 = vector.broadcast %cst_104 : f32 to vector<2x32xf32>
    %462 = arith.addf %461, %460 : vector<2x32xf32>
    %463 = arith.divf %461, %462 : vector<2x32xf32>
    %464 = vector.extract_strided_slice %260 {offsets = [12, 64], sizes = [2, 32], strides = [1, 1]} : vector<16x96xf32> to vector<2x32xf32>
    %465 = vector.extract_strided_slice %447 {offsets = [0, 64], sizes = [2, 32], strides = [1, 1]} : vector<2x96xf32> to vector<2x32xf32>
    %466 = arith.addf %465, %264 : vector<2x32xf32>
    %467 = arith.mulf %455, %466 : vector<2x32xf32>
    %468 = arith.addf %464, %467 : vector<2x32xf32>
    %469 = math.tanh %468 : vector<2x32xf32>
    %cst_105 = arith.constant 1.000000e+00 : f32
    %470 = vector.broadcast %cst_105 : f32 to vector<2x32xf32>
    %471 = arith.subf %470, %463 : vector<2x32xf32>
    %472 = arith.mulf %471, %469 : vector<2x32xf32>
    %473 = arith.mulf %463, %444 : vector<2x32xf32>
    %474 = arith.addf %472, %473 : vector<2x32xf32>
    %c12_106 = arith.constant 12 : index
    %c0_107 = arith.constant 0 : index
    %475 = vector.load %arg13[%c12_106, %c0_107] : memref<16x32xf32, #tpu.memory_space<vmem>>, vector<2x32xf32>
    tpu.vector_store %arg13[%c12_106, %c0_107], %474 {strides = array<i32>} : memref<16x32xf32, #tpu.memory_space<vmem>>, vector<2x32xf32>,
    %476 = arith.truncf %474 : vector<2x32xf32> to vector<2x32xbf16>
    %cst_108 = arith.constant dense<0.000000e+00> : vector<2x96xf32>
    %477 = tpu.matmul %476, %261, %cst_108 {dimension_numbers = #tpu.dot_dimension_numbers<[1], [0], [0], [1], [0, 0, 1, 1], [], []>} : vector<2x32xbf16>, vector<32x96xbf16>, vector<2x96xf32> -> vector<2x96xf32>
    %478 = vector.extract_strided_slice %260 {offsets = [14, 0], sizes = [2, 32], strides = [1, 1]} : vector<16x96xf32> to vector<2x32xf32>
    %479 = vector.extract_strided_slice %477 {offsets = [0, 0], sizes = [2, 32], strides = [1, 1]} : vector<2x96xf32> to vector<2x32xf32>
    %480 = arith.addf %478, %479 : vector<2x32xf32>
    %481 = arith.negf %480 : vector<2x32xf32>
    %482 = math.exp %481 : vector<2x32xf32>
    %cst_109 = arith.constant 1.000000e+00 : f32
    %483 = vector.broadcast %cst_109 : f32 to vector<2x32xf32>
    %484 = arith.addf %483, %482 : vector<2x32xf32>
    %485 = arith.divf %483, %484 : vector<2x32xf32>
    %486 = vector.extract_strided_slice %260 {offsets = [14, 32], sizes = [2, 32], strides = [1, 1]} : vector<16x96xf32> to vector<2x32xf32>
    %487 = vector.extract_strided_slice %477 {offsets = [0, 32], sizes = [2, 32], strides = [1, 1]} : vector<2x96xf32> to vector<2x32xf32>
    %488 = arith.addf %486, %487 : vector<2x32xf32>
    %489 = arith.negf %488 : vector<2x32xf32>
    %490 = math.exp %489 : vector<2x32xf32>
    %cst_110 = arith.constant 1.000000e+00 : f32
    %491 = vector.broadcast %cst_110 : f32 to vector<2x32xf32>
    %492 = arith.addf %491, %490 : vector<2x32xf32>
    %493 = arith.divf %491, %492 : vector<2x32xf32>
    %494 = vector.extract_strided_slice %260 {offsets = [14, 64], sizes = [2, 32], strides = [1, 1]} : vector<16x96xf32> to vector<2x32xf32>
    %495 = vector.extract_strided_slice %477 {offsets = [0, 64], sizes = [2, 32], strides = [1, 1]} : vector<2x96xf32> to vector<2x32xf32>
    %496 = arith.addf %495, %264 : vector<2x32xf32>
    %497 = arith.mulf %485, %496 : vector<2x32xf32>
    %498 = arith.addf %494, %497 : vector<2x32xf32>
    %499 = math.tanh %498 : vector<2x32xf32>
    %cst_111 = arith.constant 1.000000e+00 : f32
    %500 = vector.broadcast %cst_111 : f32 to vector<2x32xf32>
    %501 = arith.subf %500, %493 : vector<2x32xf32>
    %502 = arith.mulf %501, %499 : vector<2x32xf32>
    %503 = arith.mulf %493, %474 : vector<2x32xf32>
    %504 = arith.addf %502, %503 : vector<2x32xf32>
    %c14_112 = arith.constant 14 : index
    %c0_113 = arith.constant 0 : index
    %505 = vector.load %arg13[%c14_112, %c0_113] : memref<16x32xf32, #tpu.memory_space<vmem>>, vector<2x32xf32>
    tpu.vector_store %arg13[%c14_112, %c0_113], %504 {strides = array<i32>} : memref<16x32xf32, #tpu.memory_space<vmem>>, vector<2x32xf32>,
    %c1 = arith.constant 1 : index
    %c0_114 = arith.constant 0 : index
    %c0_115 = arith.constant 0 : index
    %506 = vector.load %arg12[%c1, %c0_114, %c0_115] : memref<2x2x32xf32, #tpu.memory_space<vmem>>, vector<1x2x32xf32>
    %507 = vector.shape_cast %506 : vector<1x2x32xf32> to vector<2x32xf32>
    %508 = vector.shape_cast %504 : vector<2x32xf32> to vector<1x2x32xf32>
    tpu.vector_store %arg12[%c1, %c0_114, %c0_115], %508 {strides = array<i32>} : memref<2x2x32xf32, #tpu.memory_space<vmem>>, vector<1x2x32xf32>,
    %c0_116 = arith.constant 0 : index
    %c0_117 = arith.constant 0 : index
    %509 = vector.load %arg13[%c0_116, %c0_117] : memref<16x32xf32, #tpu.memory_space<vmem>>, vector<16x32xf32>
    %c0_118 = arith.constant 0 : index
    %c0_119 = arith.constant 0 : index
    %510 = vector.load %arg9[%c0_118, %c0_119] : memref<1x32xf32, #tpu.memory_space<vmem>>, vector<1x32xf32>
    %511 = vector.broadcast %510 : vector<1x32xf32> to vector<16x32xf32>
    %512 = arith.mulf %509, %511 : vector<16x32xf32>
    %cst_120 = arith.constant dense<0.000000e+00> : vector<16xf32>
    %513 = vector.multi_reduction <add>, %512, %cst_120 [1] : vector<16x32xf32> to vector<16xf32>
    %514 = vector.shape_cast %513 : vector<16xf32> to vector<16x1xf32>
    %c0_121 = arith.constant 0 : index
    %c0_122 = arith.constant 0 : index
    %515 = vector.load %arg10[%c0_121, %c0_122] : memref<1x1xf32, #tpu.memory_space<vmem>>, vector<1x1xf32>
    %516 = vector.broadcast %515 : vector<1x1xf32> to vector<16x1xf32>
    %517 = arith.addf %514, %516 : vector<16x1xf32>
    %c0_123 = arith.constant 0 : index
    %c0_124 = arith.constant 0 : index
    %518 = vector.load %arg11[%c0_123, %c0_124] : memref<16x1xf32, #tpu.memory_space<vmem>>, vector<16x1xf32>
    tpu.vector_store %arg11[%c0_123, %c0_124], %517 {strides = array<i32>} : memref<16x1xf32, #tpu.memory_space<vmem>>, vector<16x1xf32>,
    return
  }
}

</mosaic_0001>

<llo_original>
// kernel: rnn_forward.1
$region0: #{rnn_forward.1}
  #allocation0 [shape = 'u32[]', space=smem, size = 0x4, offset = 0x4, fixed_abs, tag = 'smem constant byte address 0x4 - core index']
  #allocation1 [shape = 'u32[144,128]{1,0:T(1,128)}', space=vmem, size = 0x12000, scoped, tag = 'internal scratch']
  #allocation2 [shape = 'f32[16,32]{1,0:T(8,128)}', space=vmem, size = 0x2000, scoped, tag = 'scratch operand']
  #allocation3 [shape = 'f32[1,1]{1,0:T(1,128)S(1)}', space=vmem, size = 0x200, scoped, tag = 'scoped memory for rnn_forward.1']
  %s0 = inlined_call_operand.vmem [shape: bf16[16,32], index: 0, kind: input, shape index: {}]
  %s1 = inlined_call_operand.vmem [shape: bf16[32,96], index: 1, kind: input, shape index: {}]
  %s2 = inlined_call_operand.vmem [shape: bf16[32,96], index: 2, kind: input, shape index: {}]
  %s3 = inlined_call_operand.vmem [shape: f32[1,96], index: 3, kind: input, shape index: {}]
  %s4 = inlined_call_operand.vmem [shape: f32[1,32], index: 4, kind: input, shape index: {}]
  %s5 = inlined_call_operand.vmem [shape: bf16[32,96], index: 5, kind: input, shape index: {}]
  %s6 = inlined_call_operand.vmem [shape: bf16[32,96], index: 6, kind: input, shape index: {}]
  %s7 = inlined_call_operand.vmem [shape: f32[1,96], index: 7, kind: input, shape index: {}]
  %s8 = inlined_call_operand.vmem [shape: f32[1,32], index: 8, kind: input, shape index: {}]
  %s9 = inlined_call_operand.vmem [shape: f32[1,32], index: 9, kind: input, shape index: {}]
  %s10 = inlined_call_operand.<no memory space> [shape: f32[1,1], index: 10, kind: input, shape index: {}]
  %s11 = inlined_call_operand.vmem [shape: f32[16,1], index: 11, kind: output, shape index: {0}]
  %s12 = inlined_call_operand.hbm [shape: f32[2,2,32], index: 12, kind: output, shape index: {1}]
  %13 = xla_tuple %s11, %s12
  %s14 = sld [smem:[#allocation0]]
  $region62: #{rnn_forward.1} parent=0
    _
  %s16 = ssub.s32 1, %s14
  %s17 = scalar_select 0, %s16, %s14
  %v18 = vstv %s10
  %19 = vst [vmem:[#allocation3] sm:$0x1] %v18
  $region1: #{rnn_forward.1} parent=0
    #allocation4 [shape = 'u8[2048]{0}', space=vmem, size = 0x800, scoped, tag = 'output window, operand 1, single buffered']
    #allocation5 [shape = 's32[1]{0}', space=sflag, size = 0x4, scoped, tag = 'scoped memory for rnn_forward.1']
    %20 = vsyncpa [#allocation5], 0
    // Predicated region
    $region2: #{rnn_forward.1} parent=1 // pred_check
      _
    $region3: #{rnn_forward.1} parent=1 // pred_check_branch
      %22 = sbr.rel (0) target = $region5
    $region4: #{rnn_forward.1} parent=1 // pred_region
      _
    $region5: #{rnn_forward.1} parent=1 // pred_fallthru
      _
    // Predicated region
    $region6: #{rnn_forward.1} parent=1 // pred_check
      _
    $region7: #{rnn_forward.1} parent=1 // pred_check_branch
      %24 = sbr.rel (0) target = $region9
    $region8: #{rnn_forward.1} parent=1 // pred_region
      _
    $region9: #{rnn_forward.1} parent=1 // pred_fallthru
      _
    // Predicated region
    $region10: #{rnn_forward.1} parent=1 // pred_check
      _
    $region11: #{rnn_forward.1} parent=1 // pred_check_branch
      %26 = sbr.rel (0) target = $region13
    $region12: #{rnn_forward.1} parent=1 // pred_region
      _
    $region13: #{rnn_forward.1} parent=1 // pred_fallthru
      _
    // Predicated region
    $region14: #{rnn_forward.1} parent=1 // pred_check
      _
    $region15: #{rnn_forward.1} parent=1 // pred_check_branch
      %28 = sbr.rel (0) target = $region17
    $region16: #{rnn_forward.1} parent=1 // pred_region
      _
    $region17: #{rnn_forward.1} parent=1 // pred_fallthru
      _
    // Predicated region
    $region18: #{rnn_forward.1} parent=1 // pred_check
      _
    $region19: #{rnn_forward.1} parent=1 // pred_check_branch
      %30 = sbr.rel (0) target = $region21
    $region20: #{rnn_forward.1} parent=1 // pred_region
      _
    $region21: #{rnn_forward.1} parent=1 // pred_fallthru
      _
    // Predicated region
    $region22: #{rnn_forward.1} parent=1 // pred_check
      _
    $region23: #{rnn_forward.1} parent=1 // pred_check_branch
      %32 = sbr.rel (0) target = $region25
    $region24: #{rnn_forward.1} parent=1 // pred_region
      _
    $region25: #{rnn_forward.1} parent=1 // pred_fallthru
      _
    // Predicated region
    $region26: #{rnn_forward.1} parent=1 // pred_check
      _
    $region27: #{rnn_forward.1} parent=1 // pred_check_branch
      %34 = sbr.rel (0) target = $region29
    $region28: #{rnn_forward.1} parent=1 // pred_region
      _
    $region29: #{rnn_forward.1} parent=1 // pred_fallthru
      _
    // Predicated region
    $region30: #{rnn_forward.1} parent=1 // pred_check
      _
    $region31: #{rnn_forward.1} parent=1 // pred_check_branch
      %36 = sbr.rel (0) target = $region33
    $region32: #{rnn_forward.1} parent=1 // pred_region
      _
    $region33: #{rnn_forward.1} parent=1 // pred_fallthru
      _
    // Predicated region
    $region34: #{rnn_forward.1} parent=1 // pred_check
      _
    $region35: #{rnn_forward.1} parent=1 // pred_check_branch
      %38 = sbr.rel (0) target = $region37
    $region36: #{rnn_forward.1} parent=1 // pred_region
      _
    $region37: #{rnn_forward.1} parent=1 // pred_fallthru
      _
    // Predicated region
    $region38: #{rnn_forward.1} parent=1 // pred_check
      _
    $region39: #{rnn_forward.1} parent=1 // pred_check_branch
      %40 = sbr.rel (0) target = $region41
    $region40: #{rnn_forward.1} parent=1 // pred_region
      _
    $region41: #{rnn_forward.1} parent=1 // pred_fallthru
      _
    // Predicated region
    $region42: #{rnn_forward.1} parent=1 // pred_check
      _
    $region43: #{rnn_forward.1} parent=1 // pred_check_branch
      %42 = sbr.rel (0) target = $region45
    $region44: #{rnn_forward.1} parent=1 // pred_region
      _
    $region45: #{rnn_forward.1} parent=1 // pred_fallthru
      _
    %v44 = vld [vmem:[%s0] sm:$0xf]
    %v45 = vld [vmem:[%s0 + $0x4] sm:$0xf]
    %v46 = vld [vmem:[%s1] sm:$0xf]
    %v47 = vld [vmem:[%s1 + $0x4] sm:$0xf]
    %v48 = vld [vmem:[%s1 + $0x8] sm:$0xf]
    %v49 = vld [vmem:[%s1 + $0xc] sm:$0xf]
    %v50 = vld [vmem:[%s3] sm:$0x1]
    %v52 = vlaneseq
    %v53 = vshrl.u32 %v52, 7
    %v54 = vsub.s32 0, %v53
    %v55 = vrot.slane %v50, %v54
    %v59 = vunpack.c.l.b16 %v44
    %v60 = vunpack.c.l.b16 %v45
    %v61 = vpack.c.b16 %v60, %v59
    %v66 = vunpack.c.l.b16 %v46
    %v67 = vunpack.c.l.b16 %v47
    %v68 = vunpack.c.l.b16 %v48
    %v69 = vunpack.c.l.b16 %v49
    %v70 = vpack.c.b16 %v67, %v66
    %v71 = vpack.c.b16 %v69, %v68
    %vm74 = vcmask 261120
    %v76 = vsel %vm74, %v61, 0
    %78 = vmatprep.subr.bf16.mxu0 0
    %79 = vmatpush1.bf16.msra.mxu0 %v70
    %80 = vmatprep.subr.bf16.mxu0 0
    %81 = vmatpush1.bf16.msra.mxu0 %v71
    %82 = vmatprep.subr.bf16.mxu0 0
    %83 = vmatpush1.bf16.msra.mxu0 0
    %84 = vmatprep.subr.bf16.mxu0 0
    %85 = vmatpush1.bf16.msra.mxu0 0
    %86 = vmatprep.subr.bf16.mxu0 0
    %87 = vmatpush1.bf16.msra.mxu0 0
    %88 = vmatprep.subr.bf16.mxu0 0
    %89 = vmatpush1.bf16.msra.mxu0 0
    %90 = vmatprep.subr.bf16.mxu0 0
    %91 = vmatpush1.bf16.msra.mxu0 0
    %92 = vmatprep.subr.bf16.mxu0 0
    %93 = vmatpush1.bf16.msra.mxu0 0
    %94 = vmatprep.subr.bf16.mxu0 0
    %95 = vmatpush1.bf16.msra.mxu0 0
    %96 = vmatprep.subr.bf16.mxu0 0
    %97 = vmatpush1.bf16.msra.mxu0 0
    %98 = vmatprep.subr.bf16.mxu0 0
    %99 = vmatpush1.bf16.msra.mxu0 0
    %100 = vmatprep.subr.bf16.mxu0 0
    %101 = vmatpush1.bf16.msra.mxu0 0
    %102 = vmatprep.subr.bf16.mxu0 0
    %103 = vmatpush1.bf16.msra.mxu0 0
    %104 = vmatprep.subr.bf16.mxu0 0
    %105 = vmatpush1.bf16.msra.mxu0 0
    %106 = vmatprep.subr.bf16.mxu0 0
    %107 = vmatpush1.bf16.msra.mxu0 0
    %108 = vmatprep.subr.bf16.mxu0 0
    %109 = vmatpush1.bf16.msra.mxu0 0
    %110 = vmatprep.mubr.bf16.mxu0 0
    %111 = vmatmul.mubr.bf16.gmra.mrb[0].mxu0 %v76
    %v112 = vpop.f32.mrb[0].mxu0
    %v113 = vadd.f32 %v55, %v112
    %v114 = vpop.f32.mrb[0].mxu0
    %v115 = vpop.f32.mrb[0].mxu0
    %v116 = vadd.f32 %v55, %v115
    %v117 = vpop.f32.mrb[0].mxu0
    %118 = vdwg.mxu0
    %v119 = vld [vmem:[%s2] sm:$0xf]
    %v120 = vld [vmem:[%s2 + $0x4] sm:$0xf]
    %v121 = vld [vmem:[%s2 + $0x8] sm:$0xf]
    %v122 = vld [vmem:[%s2 + $0xc] sm:$0xf]
    %v123 = vld [vmem:[%s4] sm:$0x1]
    %v125 = vlaneseq
    %v126 = vshrl.u32 %v125, 7
    %v127 = vsub.s32 0, %v126
    %v128 = vrot.slane %v123, %v127
    %v133 = vunpack.c.l.b16 %v119
    %v134 = vunpack.c.l.b16 %v120
    %v135 = vunpack.c.l.b16 %v121
    %v136 = vunpack.c.l.b16 %v122
    %v137 = vpack.c.b16 %v134, %v133
    %v138 = vpack.c.b16 %v136, %v135
    %v142 = vsel %vm74, 0, 0
    %144 = vmatprep.subr.bf16.mxu0 0
    %145 = vmatpush1.bf16.msra.mxu0 %v137
    %146 = vmatprep.subr.bf16.mxu0 0
    %147 = vmatpush1.bf16.msra.mxu0 %v138
    %148 = vmatprep.subr.bf16.mxu0 0
    %149 = vmatpush1.bf16.msra.mxu0 0
    %150 = vmatprep.subr.bf16.mxu0 0
    %151 = vmatpush1.bf16.msra.mxu0 0
    %152 = vmatprep.subr.bf16.mxu0 0
    %153 = vmatpush1.bf16.msra.mxu0 0
    %154 = vmatprep.subr.bf16.mxu0 0
    %155 = vmatpush1.bf16.msra.mxu0 0
    %156 = vmatprep.subr.bf16.mxu0 0
    %157 = vmatpush1.bf16.msra.mxu0 0
    %158 = vmatprep.subr.bf16.mxu0 0
    %159 = vmatpush1.bf16.msra.mxu0 0
    %160 = vmatprep.subr.bf16.mxu0 0
    %161 = vmatpush1.bf16.msra.mxu0 0
    %162 = vmatprep.subr.bf16.mxu0 0
    %163 = vmatpush1.bf16.msra.mxu0 0
    %164 = vmatprep.subr.bf16.mxu0 0
    %165 = vmatpush1.bf16.msra.mxu0 0
    %166 = vmatprep.subr.bf16.mxu0 0
    %167 = vmatpush1.bf16.msra.mxu0 0
    %168 = vmatprep.subr.bf16.mxu0 0
    %169 = vmatpush1.bf16.msra.mxu0 0
    %170 = vmatprep.subr.bf16.mxu0 0
    %171 = vmatpush1.bf16.msra.mxu0 0
    %172 = vmatprep.subr.bf16.mxu0 0
    %173 = vmatpush1.bf16.msra.mxu0 0
    %174 = vmatprep.subr.bf16.mxu0 0
    %175 = vmatpush1.bf16.msra.mxu0 0
    %176 = vmatprep.mubr.bf16.mxu0 0
    %177 = vmatmul.mubr.bf16.gmra.mrb[0].mxu0 %v142
    %v178 = vpop.f32.mrb[0].mxu0
    %v179 = vadd.f32 0.0, %v178
    %v180 = vpop.f32.mrb[0].mxu0
    %v181 = vpop.f32.mrb[0].mxu0
    %v182 = vpop.f32.mrb[0].mxu0
    %183 = vdwg.mxu0
    %v184 = vadd.f32 %v113, %v179
    %v185 = vxor.u32 %v184, 2147483648
    %v186 = vmul.f32 %v185, 1.442695
    %v187 = vpow.pop %v186
    %v188 = vadd.f32 %v187, 1.0
    %v189 = vrcp.pop %v188
    %v190 = vmul.f32 1.0, %v189
    %191 = vrot.lane.b32.xlu0 %v128, 64
    %v192 = vpop.permute.xlu0 %191
    %v194 = vadd.f32 %v179, %v192
    %196 = vrot.lane.b32.xlu0 %v194, 64
    %v197 = vpop.permute.xlu0 %196
    %v199 = vmul.f32 %v190, %v197
    %201 = vrot.lane.b32.xlu0 %v199, 64
    %v202 = vpop.permute.xlu0 %201
    %v204 = vadd.f32 %v113, %v202
    %v205 = vtanh.pop %v204
    %v206 = vsub.f32 1.0, %v190
    %208 = vrot.lane.b32.xlu0 %v205, 96
    %v209 = vpop.permute.xlu0 %208
    %v211 = vmul.f32 %v206, %v209
    %v212 = vmul.f32 %v190, 0.0
    %v213 = vadd.f32 %v211, %v212
    %215 = vrot.lane.b32.xlu0 %v213, 96
    %v216 = vpop.permute.xlu0 %215
    %vm218 = vcmask 254976
    %219 = vst.msk [vmem:[#allocation2] sm:$0x3] %vm218, %v216
    %v220 = vpack.c.bf16 %v213, %v213
    %222 = vrot.lane.b32.xlu0 %v220, 96
    %v223 = vpop.permute.xlu0 %222
    %v225 = vsel %vm74, %v223, 0
    %227 = vmatprep.subr.bf16.mxu0 0
    %228 = vmatpush1.bf16.msra.mxu0 %v137
    %229 = vmatprep.subr.bf16.mxu0 0
    %230 = vmatpush1.bf16.msra.mxu0 %v138
    %231 = vmatprep.subr.bf16.mxu0 0
    %232 = vmatpush1.bf16.msra.mxu0 0
    %233 = vmatprep.subr.bf16.mxu0 0
    %234 = vmatpush1.bf16.msra.mxu0 0
    %235 = vmatprep.subr.bf16.mxu0 0
    %236 = vmatpush1.bf16.msra.mxu0 0
    %237 = vmatprep.subr.bf16.mxu0 0
    %238 = vmatpush1.bf16.msra.mxu0 0
    %239 = vmatprep.subr.bf16.mxu0 0
    %240 = vmatpush1.bf16.msra.mxu0 0
    %241 = vmatprep.subr.bf16.mxu0 0
    %242 = vmatpush1.bf16.msra.mxu0 0
    %243 = vmatprep.subr.bf16.mxu0 0
    %244 = vmatpush1.bf16.msra.mxu0 0
    %245 = vmatprep.subr.bf16.mxu0 0
    %246 = vmatpush1.bf16.msra.mxu0 0
    %247 = vmatprep.subr.bf16.mxu0 0
    %248 = vmatpush1.bf16.msra.mxu0 0
    %249 = vmatprep.subr.bf16.mxu0 0
    %250 = vmatpush1.bf16.msra.mxu0 0
    %251 = vmatprep.subr.bf16.mxu0 0
    %252 = vmatpush1.bf16.msra.mxu0 0
    %253 = vmatprep.subr.bf16.mxu0 0
    %254 = vmatpush1.bf16.msra.mxu0 0
    %255 = vmatprep.subr.bf16.mxu0 0
    %256 = vmatpush1.bf16.msra.mxu0 0
    %257 = vmatprep.subr.bf16.mxu0 0
    %258 = vmatpush1.bf16.msra.mxu0 0
    %259 = vmatprep.mubr.bf16.mxu0 0
    %260 = vmatmul.mubr.bf16.gmra.mrb[0].mxu0 %v225
    %v261 = vpop.f32.mrb[0].mxu0
    %v262 = vadd.f32 0.0, %v261
    %v263 = vpop.f32.mrb[0].mxu0
    %v264 = vpop.f32.mrb[0].mxu0
    %v265 = vpop.f32.mrb[0].mxu0
    %266 = vdwg.mxu0
    %v268 = vrot.slane %v262, 6
    %v270 = vadd.f32 %v113, %v268
    %v271 = vxor.u32 %v270, 2147483648
    %v272 = vmul.f32 %v271, 1.442695
    %v273 = vpow.pop %v272
    %v274 = vadd.f32 %v273, 1.0
    %v275 = vrcp.pop %v274
    %v276 = vmul.f32 1.0, %v275
    %v277 = vadd.f32 %v262, %v192
    %v279 = vrot.slane %v277, 6
    %280 = vrot.lane.b32.xlu0 %v279, 64
    %v281 = vpop.permute.xlu0 %280
    %v283 = vmul.f32 %v276, %v281
    %285 = vrot.lane.b32.xlu0 %v283, 64
    %v286 = vpop.permute.xlu0 %285
    %v288 = vadd.f32 %v113, %v286
    %v289 = vtanh.pop %v288
    %v290 = vsub.f32 1.0, %v276
    %292 = vrot.lane.b32.xlu0 %v289, 96
    %v293 = vpop.permute.xlu0 %292
    %v295 = vmul.f32 %v290, %v293
    %v296 = vrot.slane %v213, 6
    %v298 = vmul.f32 %v276, %v296
    %v299 = vadd.f32 %v295, %v298
    %301 = vrot.lane.b32.xlu0 %v299, 96
    %v302 = vpop.permute.xlu0 %301
    %vm304 = vcmask 257026
    %305 = vst.msk [vmem:[#allocation2] sm:$0xc] %vm304, %v302
    %v306 = vpack.c.bf16 %v299, %v299
    %v308 = vrot.slane %v306, 1
    %309 = vrot.lane.b32.xlu0 %v308, 96
    %v310 = vpop.permute.xlu0 %309
    %v312 = vsel %vm74, %v310, 0
    %314 = vmatprep.subr.bf16.mxu0 0
    %315 = vmatpush1.bf16.msra.mxu0 %v137
    %316 = vmatprep.subr.bf16.mxu0 0
    %317 = vmatpush1.bf16.msra.mxu0 %v138
    %318 = vmatprep.subr.bf16.mxu0 0
    %319 = vmatpush1.bf16.msra.mxu0 0
    %320 = vmatprep.subr.bf16.mxu0 0
    %321 = vmatpush1.bf16.msra.mxu0 0
    %322 = vmatprep.subr.bf16.mxu0 0
    %323 = vmatpush1.bf16.msra.mxu0 0
    %324 = vmatprep.subr.bf16.mxu0 0
    %325 = vmatpush1.bf16.msra.mxu0 0
    %326 = vmatprep.subr.bf16.mxu0 0
    %327 = vmatpush1.bf16.msra.mxu0 0
    %328 = vmatprep.subr.bf16.mxu0 0
    %329 = vmatpush1.bf16.msra.mxu0 0
    %330 = vmatprep.subr.bf16.mxu0 0
    %331 = vmatpush1.bf16.msra.mxu0 0
    %332 = vmatprep.subr.bf16.mxu0 0
    %333 = vmatpush1.bf16.msra.mxu0 0
    %334 = vmatprep.subr.bf16.mxu0 0
    %335 = vmatpush1.bf16.msra.mxu0 0
    %336 = vmatprep.subr.bf16.mxu0 0
    %337 = vmatpush1.bf16.msra.mxu0 0
    %338 = vmatprep.subr.bf16.mxu0 0
    %339 = vmatpush1.bf16.msra.mxu0 0
    %340 = vmatprep.subr.bf16.mxu0 0
    %341 = vmatpush1.bf16.msra.mxu0 0
    %342 = vmatprep.subr.bf16.mxu0 0
    %343 = vmatpush1.bf16.msra.mxu0 0
    %344 = vmatprep.subr.bf16.mxu0 0
    %345 = vmatpush1.bf16.msra.mxu0 0
    %346 = vmatprep.mubr.bf16.mxu0 0
    %347 = vmatmul.mubr.bf16.gmra.mrb[0].mxu0 %v312
    %v348 = vpop.f32.mrb[0].mxu0
    %v349 = vadd.f32 0.0, %v348
    %v350 = vpop.f32.mrb[0].mxu0
    %v351 = vpop.f32.mrb[0].mxu0
    %v352 = vpop.f32.mrb[0].mxu0
    %353 = vdwg.mxu0
    %v355 = vrot.slane %v349, 4
    %v357 = vadd.f32 %v113, %v355
    %v358 = vxor.u32 %v357, 2147483648
    %v359 = vmul.f32 %v358, 1.442695
    %v360 = vpow.pop %v359
    %v361 = vadd.f32 %v360, 1.0
    %v362 = vrcp.pop %v361
    %v363 = vmul.f32 1.0, %v362
    %v364 = vadd.f32 %v349, %v192
    %v366 = vrot.slane %v364, 4
    %367 = vrot.lane.b32.xlu0 %v366, 64
    %v368 = vpop.permute.xlu0 %367
    %v370 = vmul.f32 %v363, %v368
    %372 = vrot.lane.b32.xlu0 %v370, 64
    %v373 = vpop.permute.xlu0 %372
    %v375 = vadd.f32 %v113, %v373
    %v376 = vtanh.pop %v375
    %v377 = vsub.f32 1.0, %v363
    %379 = vrot.lane.b32.xlu0 %v376, 96
    %v380 = vpop.permute.xlu0 %379
    %v382 = vmul.f32 %v377, %v380
    %v383 = vrot.slane %v299, 6
    %v385 = vmul.f32 %v363, %v383
    %v386 = vadd.f32 %v382, %v385
    %388 = vrot.lane.b32.xlu0 %v386, 96
    %v389 = vpop.permute.xlu0 %388
    %vm391 = vcmask 259076
    %392 = vst.msk [vmem:[#allocation2] sm:$0x30] %vm391, %v389
    %v393 = vpack.c.bf16 %v386, %v386
    %v395 = vrot.slane %v393, 2
    %396 = vrot.lane.b32.xlu0 %v395, 96
    %v397 = vpop.permute.xlu0 %396
    %v399 = vsel %vm74, %v397, 0
    %401 = vmatprep.subr.bf16.mxu0 0
    %402 = vmatpush1.bf16.msra.mxu0 %v137
    %403 = vmatprep.subr.bf16.mxu0 0
    %404 = vmatpush1.bf16.msra.mxu0 %v138
    %405 = vmatprep.subr.bf16.mxu0 0
    %406 = vmatpush1.bf16.msra.mxu0 0
    %407 = vmatprep.subr.bf16.mxu0 0
    %408 = vmatpush1.bf16.msra.mxu0 0
    %409 = vmatprep.subr.bf16.mxu0 0
    %410 = vmatpush1.bf16.msra.mxu0 0
    %411 = vmatprep.subr.bf16.mxu0 0
    %412 = vmatpush1.bf16.msra.mxu0 0
    %413 = vmatprep.subr.bf16.mxu0 0
    %414 = vmatpush1.bf16.msra.mxu0 0
    %415 = vmatprep.subr.bf16.mxu0 0
    %416 = vmatpush1.bf16.msra.mxu0 0
    %417 = vmatprep.subr.bf16.mxu0 0
    %418 = vmatpush1.bf16.msra.mxu0 0
    %419 = vmatprep.subr.bf16.mxu0 0
    %420 = vmatpush1.bf16.msra.mxu0 0
    %421 = vmatprep.subr.bf16.mxu0 0
    %422 = vmatpush1.bf16.msra.mxu0 0
    %423 = vmatprep.subr.bf16.mxu0 0
    %424 = vmatpush1.bf16.msra.mxu0 0
    %425 = vmatprep.subr.bf16.mxu0 0
    %426 = vmatpush1.bf16.msra.mxu0 0
    %427 = vmatprep.subr.bf16.mxu0 0
    %428 = vmatpush1.bf16.msra.mxu0 0
    %429 = vmatprep.subr.bf16.mxu0 0
    %430 = vmatpush1.bf16.msra.mxu0 0
    %431 = vmatprep.subr.bf16.mxu0 0
    %432 = vmatpush1.bf16.msra.mxu0 0
    %433 = vmatprep.mubr.bf16.mxu0 0
    %434 = vmatmul.mubr.bf16.gmra.mrb[0].mxu0 %v399
    %v435 = vpop.f32.mrb[0].mxu0
    %v436 = vadd.f32 0.0, %v435
    %v437 = vpop.f32.mrb[0].mxu0
    %v438 = vpop.f32.mrb[0].mxu0
    %v439 = vpop.f32.mrb[0].mxu0
    %440 = vdwg.mxu0
    %v442 = vrot.slane %v436, 2
    %v444 = vadd.f32 %v113, %v442
    %v445 = vxor.u32 %v444, 2147483648
    %v446 = vmul.f32 %v445, 1.442695
    %v447 = vpow.pop %v446
    %v448 = vadd.f32 %v447, 1.0
    %v449 = vrcp.pop %v448
    %v450 = vmul.f32 1.0, %v449
    %v451 = vadd.f32 %v436, %v192
    %v453 = vrot.slane %v451, 2
    %454 = vrot.lane.b32.xlu0 %v453, 64
    %v455 = vpop.permute.xlu0 %454
    %v457 = vmul.f32 %v450, %v455
    %459 = vrot.lane.b32.xlu0 %v457, 64
    %v460 = vpop.permute.xlu0 %459
    %v462 = vadd.f32 %v113, %v460
    %v463 = vtanh.pop %v462
    %v464 = vsub.f32 1.0, %v450
    %466 = vrot.lane.b32.xlu0 %v463, 96
    %v467 = vpop.permute.xlu0 %466
    %v469 = vmul.f32 %v464, %v467
    %v470 = vrot.slane %v386, 6
    %v472 = vmul.f32 %v450, %v470
    %v473 = vadd.f32 %v469, %v472
    %475 = vrot.lane.b32.xlu0 %v473, 96
    %v476 = vpop.permute.xlu0 %475
    %vm478 = vcmask 261126
    %479 = vst.msk [vmem:[#allocation2] sm:$0xc0] %vm478, %v476
    %v480 = vpack.c.bf16 %v473, %v473
    %v482 = vrot.slane %v480, 3
    %483 = vrot.lane.b32.xlu0 %v482, 96
    %v484 = vpop.permute.xlu0 %483
    %v486 = vsel %vm74, %v484, 0
    %488 = vmatprep.subr.bf16.mxu0 0
    %489 = vmatpush1.bf16.msra.mxu0 %v137
    %490 = vmatprep.subr.bf16.mxu0 0
    %491 = vmatpush1.bf16.msra.mxu0 %v138
    %492 = vmatprep.subr.bf16.mxu0 0
    %493 = vmatpush1.bf16.msra.mxu0 0
    %494 = vmatprep.subr.bf16.mxu0 0
    %495 = vmatpush1.bf16.msra.mxu0 0
    %496 = vmatprep.subr.bf16.mxu0 0
    %497 = vmatpush1.bf16.msra.mxu0 0
    %498 = vmatprep.subr.bf16.mxu0 0
    %499 = vmatpush1.bf16.msra.mxu0 0
    %500 = vmatprep.subr.bf16.mxu0 0
    %501 = vmatpush1.bf16.msra.mxu0 0
    %502 = vmatprep.subr.bf16.mxu0 0
    %503 = vmatpush1.bf16.msra.mxu0 0
    %504 = vmatprep.subr.bf16.mxu0 0
    %505 = vmatpush1.bf16.msra.mxu0 0
    %506 = vmatprep.subr.bf16.mxu0 0
    %507 = vmatpush1.bf16.msra.mxu0 0
    %508 = vmatprep.subr.bf16.mxu0 0
    %509 = vmatpush1.bf16.msra.mxu0 0
    %510 = vmatprep.subr.bf16.mxu0 0
    %511 = vmatpush1.bf16.msra.mxu0 0
    %512 = vmatprep.subr.bf16.mxu0 0
    %513 = vmatpush1.bf16.msra.mxu0 0
    %514 = vmatprep.subr.bf16.mxu0 0
    %515 = vmatpush1.bf16.msra.mxu0 0
    %516 = vmatprep.subr.bf16.mxu0 0
    %517 = vmatpush1.bf16.msra.mxu0 0
    %518 = vmatprep.subr.bf16.mxu0 0
    %519 = vmatpush1.bf16.msra.mxu0 0
    %520 = vmatprep.mubr.bf16.mxu0 0
    %521 = vmatmul.mubr.bf16.gmra.mrb[0].mxu0 %v486
    %v522 = vpop.f32.mrb[0].mxu0
    %v523 = vadd.f32 0.0, %v522
    %v524 = vpop.f32.mrb[0].mxu0
    %v525 = vpop.f32.mrb[0].mxu0
    %v526 = vpop.f32.mrb[0].mxu0
    %527 = vdwg.mxu0
    %v528 = vadd.f32 %v116, %v523
    %v529 = vxor.u32 %v528, 2147483648
    %v530 = vmul.f32 %v529, 1.442695
    %v531 = vpow.pop %v530
    %v532 = vadd.f32 %v531, 1.0
    %v533 = vrcp.pop %v532
    %v534 = vmul.f32 1.0, %v533
    %v535 = vadd.f32 %v523, %v192
    %537 = vrot.lane.b32.xlu0 %v535, 64
    %v538 = vpop.permute.xlu0 %537
    %v540 = vmul.f32 %v534, %v538
    %542 = vrot.lane.b32.xlu0 %v540, 64
    %v543 = vpop.permute.xlu0 %542
    %v545 = vadd.f32 %v116, %v543
    %v546 = vtanh.pop %v545
    %v547 = vsub.f32 1.0, %v534
    %549 = vrot.lane.b32.xlu0 %v546, 96
    %v550 = vpop.permute.xlu0 %549
    %v552 = vmul.f32 %v547, %v550
    %v553 = vrot.slane %v473, 6
    %v555 = vmul.f32 %v534, %v553
    %v556 = vadd.f32 %v552, %v555
    %558 = vrot.lane.b32.xlu0 %v556, 96
    %v559 = vpop.permute.xlu0 %558
    %561 = vst.msk [vmem:[#allocation2 + $0x8] sm:$0x3] %vm218, %v559
    %v562 = vpack.c.bf16 %v556, %v556
    %564 = vrot.lane.b32.xlu0 %v562, 96
    %v565 = vpop.permute.xlu0 %564
    %v567 = vsel %vm74, %v565, 0
    %569 = vmatprep.subr.bf16.mxu0 0
    %570 = vmatpush1.bf16.msra.mxu0 %v137
    %571 = vmatprep.subr.bf16.mxu0 0
    %572 = vmatpush1.bf16.msra.mxu0 %v138
    %573 = vmatprep.subr.bf16.mxu0 0
    %574 = vmatpush1.bf16.msra.mxu0 0
    %575 = vmatprep.subr.bf16.mxu0 0
    %576 = vmatpush1.bf16.msra.mxu0 0
    %577 = vmatprep.subr.bf16.mxu0 0
    %578 = vmatpush1.bf16.msra.mxu0 0
    %579 = vmatprep.subr.bf16.mxu0 0
    %580 = vmatpush1.bf16.msra.mxu0 0
    %581 = vmatprep.subr.bf16.mxu0 0
    %582 = vmatpush1.bf16.msra.mxu0 0
    %583 = vmatprep.subr.bf16.mxu0 0
    %584 = vmatpush1.bf16.msra.mxu0 0
    %585 = vmatprep.subr.bf16.mxu0 0
    %586 = vmatpush1.bf16.msra.mxu0 0
    %587 = vmatprep.subr.bf16.mxu0 0
    %588 = vmatpush1.bf16.msra.mxu0 0
    %589 = vmatprep.subr.bf16.mxu0 0
    %590 = vmatpush1.bf16.msra.mxu0 0
    %591 = vmatprep.subr.bf16.mxu0 0
    %592 = vmatpush1.bf16.msra.mxu0 0
    %593 = vmatprep.subr.bf16.mxu0 0
    %594 = vmatpush1.bf16.msra.mxu0 0
    %595 = vmatprep.subr.bf16.mxu0 0
    %596 = vmatpush1.bf16.msra.mxu0 0
    %597 = vmatprep.subr.bf16.mxu0 0
    %598 = vmatpush1.bf16.msra.mxu0 0
    %599 = vmatprep.subr.bf16.mxu0 0
    %600 = vmatpush1.bf16.msra.mxu0 0
    %601 = vmatprep.mubr.bf16.mxu0 0
    %602 = vmatmul.mubr.bf16.gmra.mrb[0].mxu0 %v567
    %v603 = vpop.f32.mrb[0].mxu0
    %v604 = vadd.f32 0.0, %v603
    %v605 = vpop.f32.mrb[0].mxu0
    %v606 = vpop.f32.mrb[0].mxu0
    %v607 = vpop.f32.mrb[0].mxu0
    %608 = vdwg.mxu0
    %v610 = vrot.slane %v604, 6
    %v612 = vadd.f32 %v116, %v610
    %v613 = vxor.u32 %v612, 2147483648
    %v614 = vmul.f32 %v613, 1.442695
    %v615 = vpow.pop %v614
    %v616 = vadd.f32 %v615, 1.0
    %v617 = vrcp.pop %v616
    %v618 = vmul.f32 1.0, %v617
    %v619 = vadd.f32 %v604, %v192
    %v621 = vrot.slane %v619, 6
    %622 = vrot.lane.b32.xlu0 %v621, 64
    %v623 = vpop.permute.xlu0 %622
    %v625 = vmul.f32 %v618, %v623
    %627 = vrot.lane.b32.xlu0 %v625, 64
    %v628 = vpop.permute.xlu0 %627
    %v630 = vadd.f32 %v116, %v628
    %v631 = vtanh.pop %v630
    %v632 = vsub.f32 1.0, %v618
    %634 = vrot.lane.b32.xlu0 %v631, 96
    %v635 = vpop.permute.xlu0 %634
    %v637 = vmul.f32 %v632, %v635
    %v638 = vrot.slane %v556, 6
    %v640 = vmul.f32 %v618, %v638
    %v641 = vadd.f32 %v637, %v640
    %643 = vrot.lane.b32.xlu0 %v641, 96
    %v644 = vpop.permute.xlu0 %643
    %646 = vst.msk [vmem:[#allocation2 + $0x8] sm:$0xc] %vm304, %v644
    %v647 = vpack.c.bf16 %v641, %v641
    %v649 = vrot.slane %v647, 1
    %650 = vrot.lane.b32.xlu0 %v649, 96
    %v651 = vpop.permute.xlu0 %650
    %v653 = vsel %vm74, %v651, 0
    %655 = vmatprep.subr.bf16.mxu0 0
    %656 = vmatpush1.bf16.msra.mxu0 %v137
    %657 = vmatprep.subr.bf16.mxu0 0
    %658 = vmatpush1.bf16.msra.mxu0 %v138
    %659 = vmatprep.subr.bf16.mxu0 0
    %660 = vmatpush1.bf16.msra.mxu0 0
    %661 = vmatprep.subr.bf16.mxu0 0
    %662 = vmatpush1.bf16.msra.mxu0 0
    %663 = vmatprep.subr.bf16.mxu0 0
    %664 = vmatpush1.bf16.msra.mxu0 0
    %665 = vmatprep.subr.bf16.mxu0 0
    %666 = vmatpush1.bf16.msra.mxu0 0
    %667 = vmatprep.subr.bf16.mxu0 0
    %668 = vmatpush1.bf16.msra.mxu0 0
    %669 = vmatprep.subr.bf16.mxu0 0
    %670 = vmatpush1.bf16.msra.mxu0 0
    %671 = vmatprep.subr.bf16.mxu0 0
    %672 = vmatpush1.bf16.msra.mxu0 0
    %673 = vmatprep.subr.bf16.mxu0 0
    %674 = vmatpush1.bf16.msra.mxu0 0
    %675 = vmatprep.subr.bf16.mxu0 0
    %676 = vmatpush1.bf16.msra.mxu0 0
    %677 = vmatprep.subr.bf16.mxu0 0
    %678 = vmatpush1.bf16.msra.mxu0 0
    %679 = vmatprep.subr.bf16.mxu0 0
    %680 = vmatpush1.bf16.msra.mxu0 0
    %681 = vmatprep.subr.bf16.mxu0 0
    %682 = vmatpush1.bf16.msra.mxu0 0
    %683 = vmatprep.subr.bf16.mxu0 0
    %684 = vmatpush1.bf16.msra.mxu0 0
    %685 = vmatprep.subr.bf16.mxu0 0
    %686 = vmatpush1.bf16.msra.mxu0 0
    %687 = vmatprep.mubr.bf16.mxu0 0
    %688 = vmatmul.mubr.bf16.gmra.mrb[0].mxu0 %v653
    %v689 = vpop.f32.mrb[0].mxu0
    %v690 = vadd.f32 0.0, %v689
    %v691 = vpop.f32.mrb[0].mxu0
    %v692 = vpop.f32.mrb[0].mxu0
    %v693 = vpop.f32.mrb[0].mxu0
    %694 = vdwg.mxu0
    %v696 = vrot.slane %v690, 4
    %v698 = vadd.f32 %v116, %v696
    %v699 = vxor.u32 %v698, 2147483648
    %v700 = vmul.f32 %v699, 1.442695
    %v701 = vpow.pop %v700
    %v702 = vadd.f32 %v701, 1.0
    %v703 = vrcp.pop %v702
    %v704 = vmul.f32 1.0, %v703
    %v705 = vadd.f32 %v690, %v192
    %v707 = vrot.slane %v705, 4
    %708 = vrot.lane.b32.xlu0 %v707, 64
    %v709 = vpop.permute.xlu0 %708
    %v711 = vmul.f32 %v704, %v709
    %713 = vrot.lane.b32.xlu0 %v711, 64
    %v714 = vpop.permute.xlu0 %713
    %v716 = vadd.f32 %v116, %v714
    %v717 = vtanh.pop %v716
    %v718 = vsub.f32 1.0, %v704
    %720 = vrot.lane.b32.xlu0 %v717, 96
    %v721 = vpop.permute.xlu0 %720
    %v723 = vmul.f32 %v718, %v721
    %v724 = vrot.slane %v641, 6
    %v726 = vmul.f32 %v704, %v724
    %v727 = vadd.f32 %v723, %v726
    %729 = vrot.lane.b32.xlu0 %v727, 96
    %v730 = vpop.permute.xlu0 %729
    %732 = vst.msk [vmem:[#allocation2 + $0x8] sm:$0x30] %vm391, %v730
    %v733 = vpack.c.bf16 %v727, %v727
    %v735 = vrot.slane %v733, 2
    %736 = vrot.lane.b32.xlu0 %v735, 96
    %v737 = vpop.permute.xlu0 %736
    %v739 = vsel %vm74, %v737, 0
    %741 = vmatprep.subr.bf16.mxu0 0
    %742 = vmatpush1.bf16.msra.mxu0 %v137
    %743 = vmatprep.subr.bf16.mxu0 0
    %744 = vmatpush1.bf16.msra.mxu0 %v138
    %745 = vmatprep.subr.bf16.mxu0 0
    %746 = vmatpush1.bf16.msra.mxu0 0
    %747 = vmatprep.subr.bf16.mxu0 0
    %748 = vmatpush1.bf16.msra.mxu0 0
    %749 = vmatprep.subr.bf16.mxu0 0
    %750 = vmatpush1.bf16.msra.mxu0 0
    %751 = vmatprep.subr.bf16.mxu0 0
    %752 = vmatpush1.bf16.msra.mxu0 0
    %753 = vmatprep.subr.bf16.mxu0 0
    %754 = vmatpush1.bf16.msra.mxu0 0
    %755 = vmatprep.subr.bf16.mxu0 0
    %756 = vmatpush1.bf16.msra.mxu0 0
    %757 = vmatprep.subr.bf16.mxu0 0
    %758 = vmatpush1.bf16.msra.mxu0 0
    %759 = vmatprep.subr.bf16.mxu0 0
    %760 = vmatpush1.bf16.msra.mxu0 0
    %761 = vmatprep.subr.bf16.mxu0 0
    %762 = vmatpush1.bf16.msra.mxu0 0
    %763 = vmatprep.subr.bf16.mxu0 0
    %764 = vmatpush1.bf16.msra.mxu0 0
    %765 = vmatprep.subr.bf16.mxu0 0
    %766 = vmatpush1.bf16.msra.mxu0 0
    %767 = vmatprep.subr.bf16.mxu0 0
    %768 = vmatpush1.bf16.msra.mxu0 0
    %769 = vmatprep.subr.bf16.mxu0 0
    %770 = vmatpush1.bf16.msra.mxu0 0
    %771 = vmatprep.subr.bf16.mxu0 0
    %772 = vmatpush1.bf16.msra.mxu0 0
    %773 = vmatprep.mubr.bf16.mxu0 0
    %774 = vmatmul.mubr.bf16.gmra.mrb[0].mxu0 %v739
    %v775 = vpop.f32.mrb[0].mxu0
    %v776 = vadd.f32 0.0, %v775
    %v777 = vpop.f32.mrb[0].mxu0
    %v778 = vpop.f32.mrb[0].mxu0
    %v779 = vpop.f32.mrb[0].mxu0
    %780 = vdwg.mxu0
    %v782 = vrot.slane %v776, 2
    %v784 = vadd.f32 %v116, %v782
    %v785 = vxor.u32 %v784, 2147483648
    %v786 = vmul.f32 %v785, 1.442695
    %v787 = vpow.pop %v786
    %v788 = vadd.f32 %v787, 1.0
    %v789 = vrcp.pop %v788
    %v790 = vmul.f32 1.0, %v789
    %v791 = vadd.f32 %v776, %v192
    %v793 = vrot.slane %v791, 2
    %794 = vrot.lane.b32.xlu0 %v793, 64
    %v795 = vpop.permute.xlu0 %794
    %v797 = vmul.f32 %v790, %v795
    %799 = vrot.lane.b32.xlu0 %v797, 64
    %v800 = vpop.permute.xlu0 %799
    %v802 = vadd.f32 %v116, %v800
    %v803 = vtanh.pop %v802
    %v804 = vsub.f32 1.0, %v790
    %806 = vrot.lane.b32.xlu0 %v803, 96
    %v807 = vpop.permute.xlu0 %806
    %v809 = vmul.f32 %v804, %v807
    %v810 = vrot.slane %v727, 6
    %v812 = vmul.f32 %v790, %v810
    %v813 = vadd.f32 %v809, %v812
    %815 = vrot.lane.b32.xlu0 %v813, 96
    %v816 = vpop.permute.xlu0 %815
    %818 = vst.msk [vmem:[#allocation2 + $0x8] sm:$0xc0] %vm478, %v816
    %819 = vst.msk [vmem:[#allocation4 - $0x6] sm:$0xc0] %vm478, %v816
    %v820 = vld [vmem:[#allocation2] sm:$0xff]
    %v821 = vld [vmem:[#allocation2 + $0x8] sm:$0xff]
    %v822 = vpack.c.bf16 %v821, %v820
    %v823 = vld [vmem:[%s5] sm:$0xf]
    %v824 = vld [vmem:[%s5 + $0x4] sm:$0xf]
    %v825 = vld [vmem:[%s5 + $0x8] sm:$0xf]
    %v826 = vld [vmem:[%s5 + $0xc] sm:$0xf]
    %v827 = vld [vmem:[%s7] sm:$0x1]
    %v829 = vlaneseq
    %v830 = vshrl.u32 %v829, 7
    %v831 = vsub.s32 0, %v830
    %v832 = vrot.slane %v827, %v831
    %v838 = vunpack.c.l.b16 %v823
    %v839 = vunpack.c.l.b16 %v824
    %v840 = vunpack.c.l.b16 %v825
    %v841 = vunpack.c.l.b16 %v826
    %v842 = vpack.c.b16 %v839, %v838
    %v843 = vpack.c.b16 %v841, %v840
    %v847 = vsel %vm74, %v822, 0
    %849 = vmatprep.subr.bf16.mxu0 0
    %850 = vmatpush1.bf16.msra.mxu0 %v842
    %851 = vmatprep.subr.bf16.mxu0 0
    %852 = vmatpush1.bf16.msra.mxu0 %v843
    %853 = vmatprep.subr.bf16.mxu0 0
    %854 = vmatpush1.bf16.msra.mxu0 0
    %855 = vmatprep.subr.bf16.mxu0 0
    %856 = vmatpush1.bf16.msra.mxu0 0
    %857 = vmatprep.subr.bf16.mxu0 0
    %858 = vmatpush1.bf16.msra.mxu0 0
    %859 = vmatprep.subr.bf16.mxu0 0
    %860 = vmatpush1.bf16.msra.mxu0 0
    %861 = vmatprep.subr.bf16.mxu0 0
    %862 = vmatpush1.bf16.msra.mxu0 0
    %863 = vmatprep.subr.bf16.mxu0 0
    %864 = vmatpush1.bf16.msra.mxu0 0
    %865 = vmatprep.subr.bf16.mxu0 0
    %866 = vmatpush1.bf16.msra.mxu0 0
    %867 = vmatprep.subr.bf16.mxu0 0
    %868 = vmatpush1.bf16.msra.mxu0 0
    %869 = vmatprep.subr.bf16.mxu0 0
    %870 = vmatpush1.bf16.msra.mxu0 0
    %871 = vmatprep.subr.bf16.mxu0 0
    %872 = vmatpush1.bf16.msra.mxu0 0
    %873 = vmatprep.subr.bf16.mxu0 0
    %874 = vmatpush1.bf16.msra.mxu0 0
    %875 = vmatprep.subr.bf16.mxu0 0
    %876 = vmatpush1.bf16.msra.mxu0 0
    %877 = vmatprep.subr.bf16.mxu0 0
    %878 = vmatpush1.bf16.msra.mxu0 0
    %879 = vmatprep.subr.bf16.mxu0 0
    %880 = vmatpush1.bf16.msra.mxu0 0
    %881 = vmatprep.mubr.bf16.mxu0 0
    %882 = vmatmul.mubr.bf16.gmra.mrb[0].mxu0 %v847
    %v883 = vpop.f32.mrb[0].mxu0
    %v884 = vadd.f32 %v832, %v883
    %v885 = vpop.f32.mrb[0].mxu0
    %v886 = vpop.f32.mrb[0].mxu0
    %v887 = vadd.f32 %v832, %v886
    %v888 = vpop.f32.mrb[0].mxu0
    %889 = vdwg.mxu0
    %v890 = vld [vmem:[%s6] sm:$0xf]
    %v891 = vld [vmem:[%s6 + $0x4] sm:$0xf]
    %v892 = vld [vmem:[%s6 + $0x8] sm:$0xf]
    %v893 = vld [vmem:[%s6 + $0xc] sm:$0xf]
    %v894 = vld [vmem:[%s8] sm:$0x1]
    %v896 = vlaneseq
    %v897 = vshrl.u32 %v896, 7
    %v898 = vsub.s32 0, %v897
    %v899 = vrot.slane %v894, %v898
    %v904 = vunpack.c.l.b16 %v890
    %v905 = vunpack.c.l.b16 %v891
    %v906 = vunpack.c.l.b16 %v892
    %v907 = vunpack.c.l.b16 %v893
    %v908 = vpack.c.b16 %v905, %v904
    %v909 = vpack.c.b16 %v907, %v906
    %912 = vmatprep.subr.bf16.mxu0 0
    %913 = vmatpush1.bf16.msra.mxu0 %v908
    %914 = vmatprep.subr.bf16.mxu0 0
    %915 = vmatpush1.bf16.msra.mxu0 %v909
    %916 = vmatprep.subr.bf16.mxu0 0
    %917 = vmatpush1.bf16.msra.mxu0 0
    %918 = vmatprep.subr.bf16.mxu0 0
    %919 = vmatpush1.bf16.msra.mxu0 0
    %920 = vmatprep.subr.bf16.mxu0 0
    %921 = vmatpush1.bf16.msra.mxu0 0
    %922 = vmatprep.subr.bf16.mxu0 0
    %923 = vmatpush1.bf16.msra.mxu0 0
    %924 = vmatprep.subr.bf16.mxu0 0
    %925 = vmatpush1.bf16.msra.mxu0 0
    %926 = vmatprep.subr.bf16.mxu0 0
    %927 = vmatpush1.bf16.msra.mxu0 0
    %928 = vmatprep.subr.bf16.mxu0 0
    %929 = vmatpush1.bf16.msra.mxu0 0
    %930 = vmatprep.subr.bf16.mxu0 0
    %931 = vmatpush1.bf16.msra.mxu0 0
    %932 = vmatprep.subr.bf16.mxu0 0
    %933 = vmatpush1.bf16.msra.mxu0 0
    %934 = vmatprep.subr.bf16.mxu0 0
    %935 = vmatpush1.bf16.msra.mxu0 0
    %936 = vmatprep.subr.bf16.mxu0 0
    %937 = vmatpush1.bf16.msra.mxu0 0
    %938 = vmatprep.subr.bf16.mxu0 0
    %939 = vmatpush1.bf16.msra.mxu0 0
    %940 = vmatprep.subr.bf16.mxu0 0
    %941 = vmatpush1.bf16.msra.mxu0 0
    %942 = vmatprep.subr.bf16.mxu0 0
    %943 = vmatpush1.bf16.msra.mxu0 0
    %944 = vmatprep.mubr.bf16.mxu0 0
    %945 = vmatmul.mubr.bf16.gmra.mrb[0].mxu0 %v142
    %v946 = vpop.f32.mrb[0].mxu0
    %v947 = vadd.f32 0.0, %v946
    %v948 = vpop.f32.mrb[0].mxu0
    %v949 = vpop.f32.mrb[0].mxu0
    %v950 = vpop.f32.mrb[0].mxu0
    %951 = vdwg.mxu0
    %v952 = vadd.f32 %v884, %v947
    %v953 = vxor.u32 %v952, 2147483648
    %v954 = vmul.f32 %v953, 1.442695
    %v955 = vpow.pop %v954
    %v956 = vadd.f32 %v955, 1.0
    %v957 = vrcp.pop %v956
    %v958 = vmul.f32 1.0, %v957
    %959 = vrot.lane.b32.xlu0 %v899, 64
    %v960 = vpop.permute.xlu0 %959
    %v962 = vadd.f32 %v947, %v960
    %964 = vrot.lane.b32.xlu0 %v962, 64
    %v965 = vpop.permute.xlu0 %964
    %v967 = vmul.f32 %v958, %v965
    %969 = vrot.lane.b32.xlu0 %v967, 64
    %v970 = vpop.permute.xlu0 %969
    %v972 = vadd.f32 %v884, %v970
    %v973 = vtanh.pop %v972
    %v974 = vsub.f32 1.0, %v958
    %976 = vrot.lane.b32.xlu0 %v973, 96
    %v977 = vpop.permute.xlu0 %976
    %v979 = vmul.f32 %v974, %v977
    %v980 = vmul.f32 %v958, 0.0
    %v981 = vadd.f32 %v979, %v980
    %983 = vrot.lane.b32.xlu0 %v981, 96
    %v984 = vpop.permute.xlu0 %983
    %986 = vst.msk [vmem:[#allocation2] sm:$0x3] %vm218, %v984
    %v987 = vpack.c.bf16 %v981, %v981
    %989 = vrot.lane.b32.xlu0 %v987, 96
    %v990 = vpop.permute.xlu0 %989
    %v992 = vsel %vm74, %v990, 0
    %994 = vmatprep.subr.bf16.mxu0 0
    %995 = vmatpush1.bf16.msra.mxu0 %v908
    %996 = vmatprep.subr.bf16.mxu0 0
    %997 = vmatpush1.bf16.msra.mxu0 %v909
    %998 = vmatprep.subr.bf16.mxu0 0
    %999 = vmatpush1.bf16.msra.mxu0 0
    %1000 = vmatprep.subr.bf16.mxu0 0
    %1001 = vmatpush1.bf16.msra.mxu0 0
    %1002 = vmatprep.subr.bf16.mxu0 0
    %1003 = vmatpush1.bf16.msra.mxu0 0
    %1004 = vmatprep.subr.bf16.mxu0 0
    %1005 = vmatpush1.bf16.msra.mxu0 0
    %1006 = vmatprep.subr.bf16.mxu0 0
    %1007 = vmatpush1.bf16.msra.mxu0 0
    %1008 = vmatprep.subr.bf16.mxu0 0
    %1009 = vmatpush1.bf16.msra.mxu0 0
    %1010 = vmatprep.subr.bf16.mxu0 0
    %1011 = vmatpush1.bf16.msra.mxu0 0
    %1012 = vmatprep.subr.bf16.mxu0 0
    %1013 = vmatpush1.bf16.msra.mxu0 0
    %1014 = vmatprep.subr.bf16.mxu0 0
    %1015 = vmatpush1.bf16.msra.mxu0 0
    %1016 = vmatprep.subr.bf16.mxu0 0
    %1017 = vmatpush1.bf16.msra.mxu0 0
    %1018 = vmatprep.subr.bf16.mxu0 0
    %1019 = vmatpush1.bf16.msra.mxu0 0
    %1020 = vmatprep.subr.bf16.mxu0 0
    %1021 = vmatpush1.bf16.msra.mxu0 0
    %1022 = vmatprep.subr.bf16.mxu0 0
    %1023 = vmatpush1.bf16.msra.mxu0 0
    %1024 = vmatprep.subr.bf16.mxu0 0
    %1025 = vmatpush1.bf16.msra.mxu0 0
    %1026 = vmatprep.mubr.bf16.mxu0 0
    %1027 = vmatmul.mubr.bf16.gmra.mrb[0].mxu0 %v992
    %v1028 = vpop.f32.mrb[0].mxu0
    %v1029 = vadd.f32 0.0, %v1028
    %v1030 = vpop.f32.mrb[0].mxu0
    %v1031 = vpop.f32.mrb[0].mxu0
    %v1032 = vpop.f32.mrb[0].mxu0
    %1033 = vdwg.mxu0
    %v1035 = vrot.slane %v1029, 6
    %v1037 = vadd.f32 %v884, %v1035
    %v1038 = vxor.u32 %v1037, 2147483648
    %v1039 = vmul.f32 %v1038, 1.442695
    %v1040 = vpow.pop %v1039
    %v1041 = vadd.f32 %v1040, 1.0
    %v1042 = vrcp.pop %v1041
    %v1043 = vmul.f32 1.0, %v1042
    %v1044 = vadd.f32 %v1029, %v960
    %v1046 = vrot.slane %v1044, 6
    %1047 = vrot.lane.b32.xlu0 %v1046, 64
    %v1048 = vpop.permute.xlu0 %1047
    %v1050 = vmul.f32 %v1043, %v1048
    %1052 = vrot.lane.b32.xlu0 %v1050, 64
    %v1053 = vpop.permute.xlu0 %1052
    %v1055 = vadd.f32 %v884, %v1053
    %v1056 = vtanh.pop %v1055
    %v1057 = vsub.f32 1.0, %v1043
    %1059 = vrot.lane.b32.xlu0 %v1056, 96
    %v1060 = vpop.permute.xlu0 %1059
    %v1062 = vmul.f32 %v1057, %v1060
    %v1063 = vrot.slane %v981, 6
    %v1065 = vmul.f32 %v1043, %v1063
    %v1066 = vadd.f32 %v1062, %v1065
    %1068 = vrot.lane.b32.xlu0 %v1066, 96
    %v1069 = vpop.permute.xlu0 %1068
    %1071 = vst.msk [vmem:[#allocation2] sm:$0xc] %vm304, %v1069
    %v1072 = vpack.c.bf16 %v1066, %v1066
    %v1074 = vrot.slane %v1072, 1
    %1075 = vrot.lane.b32.xlu0 %v1074, 96
    %v1076 = vpop.permute.xlu0 %1075
    %v1078 = vsel %vm74, %v1076, 0
    %1080 = vmatprep.subr.bf16.mxu0 0
    %1081 = vmatpush1.bf16.msra.mxu0 %v908
    %1082 = vmatprep.subr.bf16.mxu0 0
    %1083 = vmatpush1.bf16.msra.mxu0 %v909
    %1084 = vmatprep.subr.bf16.mxu0 0
    %1085 = vmatpush1.bf16.msra.mxu0 0
    %1086 = vmatprep.subr.bf16.mxu0 0
    %1087 = vmatpush1.bf16.msra.mxu0 0
    %1088 = vmatprep.subr.bf16.mxu0 0
    %1089 = vmatpush1.bf16.msra.mxu0 0
    %1090 = vmatprep.subr.bf16.mxu0 0
    %1091 = vmatpush1.bf16.msra.mxu0 0
    %1092 = vmatprep.subr.bf16.mxu0 0
    %1093 = vmatpush1.bf16.msra.mxu0 0
    %1094 = vmatprep.subr.bf16.mxu0 0
    %1095 = vmatpush1.bf16.msra.mxu0 0
    %1096 = vmatprep.subr.bf16.mxu0 0
    %1097 = vmatpush1.bf16.msra.mxu0 0
    %1098 = vmatprep.subr.bf16.mxu0 0
    %1099 = vmatpush1.bf16.msra.mxu0 0
    %1100 = vmatprep.subr.bf16.mxu0 0
    %1101 = vmatpush1.bf16.msra.mxu0 0
    %1102 = vmatprep.subr.bf16.mxu0 0
    %1103 = vmatpush1.bf16.msra.mxu0 0
    %1104 = vmatprep.subr.bf16.mxu0 0
    %1105 = vmatpush1.bf16.msra.mxu0 0
    %1106 = vmatprep.subr.bf16.mxu0 0
    %1107 = vmatpush1.bf16.msra.mxu0 0
    %1108 = vmatprep.subr.bf16.mxu0 0
    %1109 = vmatpush1.bf16.msra.mxu0 0
    %1110 = vmatprep.subr.bf16.mxu0 0
    %1111 = vmatpush1.bf16.msra.mxu0 0
    %1112 = vmatprep.mubr.bf16.mxu0 0
    %1113 = vmatmul.mubr.bf16.gmra.mrb[0].mxu0 %v1078
    %v1114 = vpop.f32.mrb[0].mxu0
    %v1115 = vadd.f32 0.0, %v1114
    %v1116 = vpop.f32.mrb[0].mxu0
    %v1117 = vpop.f32.mrb[0].mxu0
    %v1118 = vpop.f32.mrb[0].mxu0
    %1119 = vdwg.mxu0
    %v1121 = vrot.slane %v1115, 4
    %v1123 = vadd.f32 %v884, %v1121
    %v1124 = vxor.u32 %v1123, 2147483648
    %v1125 = vmul.f32 %v1124, 1.442695
    %v1126 = vpow.pop %v1125
    %v1127 = vadd.f32 %v1126, 1.0
    %v1128 = vrcp.pop %v1127
    %v1129 = vmul.f32 1.0, %v1128
    %v1130 = vadd.f32 %v1115, %v960
    %v1132 = vrot.slane %v1130, 4
    %1133 = vrot.lane.b32.xlu0 %v1132, 64
    %v1134 = vpop.permute.xlu0 %1133
    %v1136 = vmul.f32 %v1129, %v1134
    %1138 = vrot.lane.b32.xlu0 %v1136, 64
    %v1139 = vpop.permute.xlu0 %1138
    %v1141 = vadd.f32 %v884, %v1139
    %v1142 = vtanh.pop %v1141
    %v1143 = vsub.f32 1.0, %v1129
    %1145 = vrot.lane.b32.xlu0 %v1142, 96
    %v1146 = vpop.permute.xlu0 %1145
    %v1148 = vmul.f32 %v1143, %v1146
    %v1149 = vrot.slane %v1066, 6
    %v1151 = vmul.f32 %v1129, %v1149
    %v1152 = vadd.f32 %v1148, %v1151
    %1154 = vrot.lane.b32.xlu0 %v1152, 96
    %v1155 = vpop.permute.xlu0 %1154
    %1157 = vst.msk [vmem:[#allocation2] sm:$0x30] %vm391, %v1155
    %v1158 = vpack.c.bf16 %v1152, %v1152
    %v1160 = vrot.slane %v1158, 2
    %1161 = vrot.lane.b32.xlu0 %v1160, 96
    %v1162 = vpop.permute.xlu0 %1161
    %v1164 = vsel %vm74, %v1162, 0
    %1166 = vmatprep.subr.bf16.mxu0 0
    %1167 = vmatpush1.bf16.msra.mxu0 %v908
    %1168 = vmatprep.subr.bf16.mxu0 0
    %1169 = vmatpush1.bf16.msra.mxu0 %v909
    %1170 = vmatprep.subr.bf16.mxu0 0
    %1171 = vmatpush1.bf16.msra.mxu0 0
    %1172 = vmatprep.subr.bf16.mxu0 0
    %1173 = vmatpush1.bf16.msra.mxu0 0
    %1174 = vmatprep.subr.bf16.mxu0 0
    %1175 = vmatpush1.bf16.msra.mxu0 0
    %1176 = vmatprep.subr.bf16.mxu0 0
    %1177 = vmatpush1.bf16.msra.mxu0 0
    %1178 = vmatprep.subr.bf16.mxu0 0
    %1179 = vmatpush1.bf16.msra.mxu0 0
    %1180 = vmatprep.subr.bf16.mxu0 0
    %1181 = vmatpush1.bf16.msra.mxu0 0
    %1182 = vmatprep.subr.bf16.mxu0 0
    %1183 = vmatpush1.bf16.msra.mxu0 0
    %1184 = vmatprep.subr.bf16.mxu0 0
    %1185 = vmatpush1.bf16.msra.mxu0 0
    %1186 = vmatprep.subr.bf16.mxu0 0
    %1187 = vmatpush1.bf16.msra.mxu0 0
    %1188 = vmatprep.subr.bf16.mxu0 0
    %1189 = vmatpush1.bf16.msra.mxu0 0
    %1190 = vmatprep.subr.bf16.mxu0 0
    %1191 = vmatpush1.bf16.msra.mxu0 0
    %1192 = vmatprep.subr.bf16.mxu0 0
    %1193 = vmatpush1.bf16.msra.mxu0 0
    %1194 = vmatprep.subr.bf16.mxu0 0
    %1195 = vmatpush1.bf16.msra.mxu0 0
    %1196 = vmatprep.subr.bf16.mxu0 0
    %1197 = vmatpush1.bf16.msra.mxu0 0
    %1198 = vmatprep.mubr.bf16.mxu0 0
    %1199 = vmatmul.mubr.bf16.gmra.mrb[0].mxu0 %v1164
    %v1200 = vpop.f32.mrb[0].mxu0
    %v1201 = vadd.f32 0.0, %v1200
    %v1202 = vpop.f32.mrb[0].mxu0
    %v1203 = vpop.f32.mrb[0].mxu0
    %v1204 = vpop.f32.mrb[0].mxu0
    %1205 = vdwg.mxu0
    %v1207 = vrot.slane %v1201, 2
    %v1209 = vadd.f32 %v884, %v1207
    %v1210 = vxor.u32 %v1209, 2147483648
    %v1211 = vmul.f32 %v1210, 1.442695
    %v1212 = vpow.pop %v1211
    %v1213 = vadd.f32 %v1212, 1.0
    %v1214 = vrcp.pop %v1213
    %v1215 = vmul.f32 1.0, %v1214
    %v1216 = vadd.f32 %v1201, %v960
    %v1218 = vrot.slane %v1216, 2
    %1219 = vrot.lane.b32.xlu0 %v1218, 64
    %v1220 = vpop.permute.xlu0 %1219
    %v1222 = vmul.f32 %v1215, %v1220
    %1224 = vrot.lane.b32.xlu0 %v1222, 64
    %v1225 = vpop.permute.xlu0 %1224
    %v1227 = vadd.f32 %v884, %v1225
    %v1228 = vtanh.pop %v1227
    %v1229 = vsub.f32 1.0, %v1215
    %1231 = vrot.lane.b32.xlu0 %v1228, 96
    %v1232 = vpop.permute.xlu0 %1231
    %v1234 = vmul.f32 %v1229, %v1232
    %v1235 = vrot.slane %v1152, 6
    %v1237 = vmul.f32 %v1215, %v1235
    %v1238 = vadd.f32 %v1234, %v1237
    %1240 = vrot.lane.b32.xlu0 %v1238, 96
    %v1241 = vpop.permute.xlu0 %1240
    %1243 = vst.msk [vmem:[#allocation2] sm:$0xc0] %vm478, %v1241
    %v1244 = vpack.c.bf16 %v1238, %v1238
    %v1246 = vrot.slane %v1244, 3
    %1247 = vrot.lane.b32.xlu0 %v1246, 96
    %v1248 = vpop.permute.xlu0 %1247
    %v1250 = vsel %vm74, %v1248, 0
    %1252 = vmatprep.subr.bf16.mxu0 0
    %1253 = vmatpush1.bf16.msra.mxu0 %v908
    %1254 = vmatprep.subr.bf16.mxu0 0
    %1255 = vmatpush1.bf16.msra.mxu0 %v909
    %1256 = vmatprep.subr.bf16.mxu0 0
    %1257 = vmatpush1.bf16.msra.mxu0 0
    %1258 = vmatprep.subr.bf16.mxu0 0
    %1259 = vmatpush1.bf16.msra.mxu0 0
    %1260 = vmatprep.subr.bf16.mxu0 0
    %1261 = vmatpush1.bf16.msra.mxu0 0
    %1262 = vmatprep.subr.bf16.mxu0 0
    %1263 = vmatpush1.bf16.msra.mxu0 0
    %1264 = vmatprep.subr.bf16.mxu0 0
    %1265 = vmatpush1.bf16.msra.mxu0 0
    %1266 = vmatprep.subr.bf16.mxu0 0
    %1267 = vmatpush1.bf16.msra.mxu0 0
    %1268 = vmatprep.subr.bf16.mxu0 0
    %1269 = vmatpush1.bf16.msra.mxu0 0
    %1270 = vmatprep.subr.bf16.mxu0 0
    %1271 = vmatpush1.bf16.msra.mxu0 0
    %1272 = vmatprep.subr.bf16.mxu0 0
    %1273 = vmatpush1.bf16.msra.mxu0 0
    %1274 = vmatprep.subr.bf16.mxu0 0
    %1275 = vmatpush1.bf16.msra.mxu0 0
    %1276 = vmatprep.subr.bf16.mxu0 0
    %1277 = vmatpush1.bf16.msra.mxu0 0
    %1278 = vmatprep.subr.bf16.mxu0 0
    %1279 = vmatpush1.bf16.msra.mxu0 0
    %1280 = vmatprep.subr.bf16.mxu0 0
    %1281 = vmatpush1.bf16.msra.mxu0 0
    %1282 = vmatprep.subr.bf16.mxu0 0
    %1283 = vmatpush1.bf16.msra.mxu0 0
    %1284 = vmatprep.mubr.bf16.mxu0 0
    %1285 = vmatmul.mubr.bf16.gmra.mrb[0].mxu0 %v1250
    %v1286 = vpop.f32.mrb[0].mxu0
    %v1287 = vadd.f32 0.0, %v1286
    %v1288 = vpop.f32.mrb[0].mxu0
    %v1289 = vpop.f32.mrb[0].mxu0
    %v1290 = vpop.f32.mrb[0].mxu0
    %1291 = vdwg.mxu0
    %v1292 = vadd.f32 %v887, %v1287
    %v1293 = vxor.u32 %v1292, 2147483648
    %v1294 = vmul.f32 %v1293, 1.442695
    %v1295 = vpow.pop %v1294
    %v1296 = vadd.f32 %v1295, 1.0
    %v1297 = vrcp.pop %v1296
    %v1298 = vmul.f32 1.0, %v1297
    %v1299 = vadd.f32 %v1287, %v960
    %1301 = vrot.lane.b32.xlu0 %v1299, 64
    %v1302 = vpop.permute.xlu0 %1301
    %v1304 = vmul.f32 %v1298, %v1302
    %1306 = vrot.lane.b32.xlu0 %v1304, 64
    %v1307 = vpop.permute.xlu0 %1306
    %v1309 = vadd.f32 %v887, %v1307
    %v1310 = vtanh.pop %v1309
    %v1311 = vsub.f32 1.0, %v1298
    %1313 = vrot.lane.b32.xlu0 %v1310, 96
    %v1314 = vpop.permute.xlu0 %1313
    %v1316 = vmul.f32 %v1311, %v1314
    %v1317 = vrot.slane %v1238, 6
    %v1319 = vmul.f32 %v1298, %v1317
    %v1320 = vadd.f32 %v1316, %v1319
    %1322 = vrot.lane.b32.xlu0 %v1320, 96
    %v1323 = vpop.permute.xlu0 %1322
    %1325 = vst.msk [vmem:[#allocation2 + $0x8] sm:$0x3] %vm218, %v1323
    %v1326 = vpack.c.bf16 %v1320, %v1320
    %1328 = vrot.lane.b32.xlu0 %v1326, 96
    %v1329 = vpop.permute.xlu0 %1328
    %v1331 = vsel %vm74, %v1329, 0
    %1333 = vmatprep.subr.bf16.mxu0 0
    %1334 = vmatpush1.bf16.msra.mxu0 %v908
    %1335 = vmatprep.subr.bf16.mxu0 0
    %1336 = vmatpush1.bf16.msra.mxu0 %v909
    %1337 = vmatprep.subr.bf16.mxu0 0
    %1338 = vmatpush1.bf16.msra.mxu0 0
    %1339 = vmatprep.subr.bf16.mxu0 0
    %1340 = vmatpush1.bf16.msra.mxu0 0
    %1341 = vmatprep.subr.bf16.mxu0 0
    %1342 = vmatpush1.bf16.msra.mxu0 0
    %1343 = vmatprep.subr.bf16.mxu0 0
    %1344 = vmatpush1.bf16.msra.mxu0 0
    %1345 = vmatprep.subr.bf16.mxu0 0
    %1346 = vmatpush1.bf16.msra.mxu0 0
    %1347 = vmatprep.subr.bf16.mxu0 0
    %1348 = vmatpush1.bf16.msra.mxu0 0
    %1349 = vmatprep.subr.bf16.mxu0 0
    %1350 = vmatpush1.bf16.msra.mxu0 0
    %1351 = vmatprep.subr.bf16.mxu0 0
    %1352 = vmatpush1.bf16.msra.mxu0 0
    %1353 = vmatprep.subr.bf16.mxu0 0
    %1354 = vmatpush1.bf16.msra.mxu0 0
    %1355 = vmatprep.subr.bf16.mxu0 0
    %1356 = vmatpush1.bf16.msra.mxu0 0
    %1357 = vmatprep.subr.bf16.mxu0 0
    %1358 = vmatpush1.bf16.msra.mxu0 0
    %1359 = vmatprep.subr.bf16.mxu0 0
    %1360 = vmatpush1.bf16.msra.mxu0 0
    %1361 = vmatprep.subr.bf16.mxu0 0
    %1362 = vmatpush1.bf16.msra.mxu0 0
    %1363 = vmatprep.subr.bf16.mxu0 0
    %1364 = vmatpush1.bf16.msra.mxu0 0
    %1365 = vmatprep.mubr.bf16.mxu0 0
    %1366 = vmatmul.mubr.bf16.gmra.mrb[0].mxu0 %v1331
    %v1367 = vpop.f32.mrb[0].mxu0
    %v1368 = vadd.f32 0.0, %v1367
    %v1369 = vpop.f32.mrb[0].mxu0
    %v1370 = vpop.f32.mrb[0].mxu0
    %v1371 = vpop.f32.mrb[0].mxu0
    %1372 = vdwg.mxu0
    %v1374 = vrot.slane %v1368, 6
    %v1376 = vadd.f32 %v887, %v1374
    %v1377 = vxor.u32 %v1376, 2147483648
    %v1378 = vmul.f32 %v1377, 1.442695
    %v1379 = vpow.pop %v1378
    %v1380 = vadd.f32 %v1379, 1.0
    %v1381 = vrcp.pop %v1380
    %v1382 = vmul.f32 1.0, %v1381
    %v1383 = vadd.f32 %v1368, %v960
    %v1385 = vrot.slane %v1383, 6
    %1386 = vrot.lane.b32.xlu0 %v1385, 64
    %v1387 = vpop.permute.xlu0 %1386
    %v1389 = vmul.f32 %v1382, %v1387
    %1391 = vrot.lane.b32.xlu0 %v1389, 64
    %v1392 = vpop.permute.xlu0 %1391
    %v1394 = vadd.f32 %v887, %v1392
    %v1395 = vtanh.pop %v1394
    %v1396 = vsub.f32 1.0, %v1382
    %1398 = vrot.lane.b32.xlu0 %v1395, 96
    %v1399 = vpop.permute.xlu0 %1398
    %v1401 = vmul.f32 %v1396, %v1399
    %v1402 = vrot.slane %v1320, 6
    %v1404 = vmul.f32 %v1382, %v1402
    %v1405 = vadd.f32 %v1401, %v1404
    %1407 = vrot.lane.b32.xlu0 %v1405, 96
    %v1408 = vpop.permute.xlu0 %1407
    %1410 = vst.msk [vmem:[#allocation2 + $0x8] sm:$0xc] %vm304, %v1408
    %v1411 = vpack.c.bf16 %v1405, %v1405
    %v1413 = vrot.slane %v1411, 1
    %1414 = vrot.lane.b32.xlu0 %v1413, 96
    %v1415 = vpop.permute.xlu0 %1414
    %v1417 = vsel %vm74, %v1415, 0
    %1419 = vmatprep.subr.bf16.mxu0 0
    %1420 = vmatpush1.bf16.msra.mxu0 %v908
    %1421 = vmatprep.subr.bf16.mxu0 0
    %1422 = vmatpush1.bf16.msra.mxu0 %v909
    %1423 = vmatprep.subr.bf16.mxu0 0
    %1424 = vmatpush1.bf16.msra.mxu0 0
    %1425 = vmatprep.subr.bf16.mxu0 0
    %1426 = vmatpush1.bf16.msra.mxu0 0
    %1427 = vmatprep.subr.bf16.mxu0 0
    %1428 = vmatpush1.bf16.msra.mxu0 0
    %1429 = vmatprep.subr.bf16.mxu0 0
    %1430 = vmatpush1.bf16.msra.mxu0 0
    %1431 = vmatprep.subr.bf16.mxu0 0
    %1432 = vmatpush1.bf16.msra.mxu0 0
    %1433 = vmatprep.subr.bf16.mxu0 0
    %1434 = vmatpush1.bf16.msra.mxu0 0
    %1435 = vmatprep.subr.bf16.mxu0 0
    %1436 = vmatpush1.bf16.msra.mxu0 0
    %1437 = vmatprep.subr.bf16.mxu0 0
    %1438 = vmatpush1.bf16.msra.mxu0 0
    %1439 = vmatprep.subr.bf16.mxu0 0
    %1440 = vmatpush1.bf16.msra.mxu0 0
    %1441 = vmatprep.subr.bf16.mxu0 0
    %1442 = vmatpush1.bf16.msra.mxu0 0
    %1443 = vmatprep.subr.bf16.mxu0 0
    %1444 = vmatpush1.bf16.msra.mxu0 0
    %1445 = vmatprep.subr.bf16.mxu0 0
    %1446 = vmatpush1.bf16.msra.mxu0 0
    %1447 = vmatprep.subr.bf16.mxu0 0
    %1448 = vmatpush1.bf16.msra.mxu0 0
    %1449 = vmatprep.subr.bf16.mxu0 0
    %1450 = vmatpush1.bf16.msra.mxu0 0
    %1451 = vmatprep.mubr.bf16.mxu0 0
    %1452 = vmatmul.mubr.bf16.gmra.mrb[0].mxu0 %v1417
    %v1453 = vpop.f32.mrb[0].mxu0
    %v1454 = vadd.f32 0.0, %v1453
    %v1455 = vpop.f32.mrb[0].mxu0
    %v1456 = vpop.f32.mrb[0].mxu0
    %v1457 = vpop.f32.mrb[0].mxu0
    %1458 = vdwg.mxu0
    %v1460 = vrot.slane %v1454, 4
    %v1462 = vadd.f32 %v887, %v1460
    %v1463 = vxor.u32 %v1462, 2147483648
    %v1464 = vmul.f32 %v1463, 1.442695
    %v1465 = vpow.pop %v1464
    %v1466 = vadd.f32 %v1465, 1.0
    %v1467 = vrcp.pop %v1466
    %v1468 = vmul.f32 1.0, %v1467
    %v1469 = vadd.f32 %v1454, %v960
    %v1471 = vrot.slane %v1469, 4
    %1472 = vrot.lane.b32.xlu0 %v1471, 64
    %v1473 = vpop.permute.xlu0 %1472
    %v1475 = vmul.f32 %v1468, %v1473
    %1477 = vrot.lane.b32.xlu0 %v1475, 64
    %v1478 = vpop.permute.xlu0 %1477
    %v1480 = vadd.f32 %v887, %v1478
    %v1481 = vtanh.pop %v1480
    %v1482 = vsub.f32 1.0, %v1468
    %1484 = vrot.lane.b32.xlu0 %v1481, 96
    %v1485 = vpop.permute.xlu0 %1484
    %v1487 = vmul.f32 %v1482, %v1485
    %v1488 = vrot.slane %v1405, 6
    %v1490 = vmul.f32 %v1468, %v1488
    %v1491 = vadd.f32 %v1487, %v1490
    %1493 = vrot.lane.b32.xlu0 %v1491, 96
    %v1494 = vpop.permute.xlu0 %1493
    %1496 = vst.msk [vmem:[#allocation2 + $0x8] sm:$0x30] %vm391, %v1494
    %v1497 = vpack.c.bf16 %v1491, %v1491
    %v1499 = vrot.slane %v1497, 2
    %1500 = vrot.lane.b32.xlu0 %v1499, 96
    %v1501 = vpop.permute.xlu0 %1500
    %v1503 = vsel %vm74, %v1501, 0
    %1505 = vmatprep.subr.bf16.mxu0 0
    %1506 = vmatpush1.bf16.msra.mxu0 %v908
    %1507 = vmatprep.subr.bf16.mxu0 0
    %1508 = vmatpush1.bf16.msra.mxu0 %v909
    %1509 = vmatprep.subr.bf16.mxu0 0
    %1510 = vmatpush1.bf16.msra.mxu0 0
    %1511 = vmatprep.subr.bf16.mxu0 0
    %1512 = vmatpush1.bf16.msra.mxu0 0
    %1513 = vmatprep.subr.bf16.mxu0 0
    %1514 = vmatpush1.bf16.msra.mxu0 0
    %1515 = vmatprep.subr.bf16.mxu0 0
    %1516 = vmatpush1.bf16.msra.mxu0 0
    %1517 = vmatprep.subr.bf16.mxu0 0
    %1518 = vmatpush1.bf16.msra.mxu0 0
    %1519 = vmatprep.subr.bf16.mxu0 0
    %1520 = vmatpush1.bf16.msra.mxu0 0
    %1521 = vmatprep.subr.bf16.mxu0 0
    %1522 = vmatpush1.bf16.msra.mxu0 0
    %1523 = vmatprep.subr.bf16.mxu0 0
    %1524 = vmatpush1.bf16.msra.mxu0 0
    %1525 = vmatprep.subr.bf16.mxu0 0
    %1526 = vmatpush1.bf16.msra.mxu0 0
    %1527 = vmatprep.subr.bf16.mxu0 0
    %1528 = vmatpush1.bf16.msra.mxu0 0
    %1529 = vmatprep.subr.bf16.mxu0 0
    %1530 = vmatpush1.bf16.msra.mxu0 0
    %1531 = vmatprep.subr.bf16.mxu0 0
    %1532 = vmatpush1.bf16.msra.mxu0 0
    %1533 = vmatprep.subr.bf16.mxu0 0
    %1534 = vmatpush1.bf16.msra.mxu0 0
    %1535 = vmatprep.subr.bf16.mxu0 0
    %1536 = vmatpush1.bf16.msra.mxu0 0
    %1537 = vmatprep.mubr.bf16.mxu0 0
    %1538 = vmatmul.mubr.bf16.gmra.mrb[0].mxu0 %v1503
    %v1539 = vpop.f32.mrb[0].mxu0
    %v1540 = vadd.f32 0.0, %v1539
    %v1541 = vpop.f32.mrb[0].mxu0
    %v1542 = vpop.f32.mrb[0].mxu0
    %v1543 = vpop.f32.mrb[0].mxu0
    %1544 = vdwg.mxu0
    %v1546 = vrot.slane %v1540, 2
    %v1548 = vadd.f32 %v887, %v1546
    %v1549 = vxor.u32 %v1548, 2147483648
    %v1550 = vmul.f32 %v1549, 1.442695
    %v1551 = vpow.pop %v1550
    %v1552 = vadd.f32 %v1551, 1.0
    %v1553 = vrcp.pop %v1552
    %v1554 = vmul.f32 1.0, %v1553
    %v1555 = vadd.f32 %v1540, %v960
    %v1557 = vrot.slane %v1555, 2
    %1558 = vrot.lane.b32.xlu0 %v1557, 64
    %v1559 = vpop.permute.xlu0 %1558
    %v1561 = vmul.f32 %v1554, %v1559
    %1563 = vrot.lane.b32.xlu0 %v1561, 64
    %v1564 = vpop.permute.xlu0 %1563
    %v1566 = vadd.f32 %v887, %v1564
    %v1567 = vtanh.pop %v1566
    %v1568 = vsub.f32 1.0, %v1554
    %1570 = vrot.lane.b32.xlu0 %v1567, 96
    %v1571 = vpop.permute.xlu0 %1570
    %v1573 = vmul.f32 %v1568, %v1571
    %v1574 = vrot.slane %v1491, 6
    %v1576 = vmul.f32 %v1554, %v1574
    %v1577 = vadd.f32 %v1573, %v1576
    %1579 = vrot.lane.b32.xlu0 %v1577, 96
    %v1580 = vpop.permute.xlu0 %1579
    %1582 = vst.msk [vmem:[#allocation2 + $0x8] sm:$0xc0] %vm478, %v1580
    %s1583 = scalar_lea.vmem [#allocation4], 2
    %1584 = vst.msk [vmem:[%s1583 - $0x6] sm:$0xc0] %vm478, %v1580
    %v1585 = vld [vmem:[#allocation2] sm:$0xff]
    %v1586 = vld [vmem:[#allocation2 + $0x8] sm:$0xff]
    %v1587 = vld [vmem:[%s9] sm:$0x1]
    %v1589 = vlaneseq
    %v1590 = vshrl.u32 %v1589, 7
    %v1591 = vsub.s32 0, %v1590
    %v1592 = vrot.slane %v1587, %v1591
    %v1594 = vmul.f32 %v1585, %v1592
    %v1595 = vmul.f32 %v1586, %v1592
    %v1596 = vsel %vm74, %v1594, 0.0
    %1597 = vadd.xlane.f32.xlu0 %v1596
    %v1598 = vpop.xlane.xlu0 %1597
    %v1599 = vsel %vm74, %v1595, 0.0
    %1600 = vadd.xlane.f32.xlu0 %v1599
    %v1601 = vpop.xlane.xlu0 %1600
    %v1602 = vld [vmem:[#allocation3] sm:$0x1]
    %v1604 = vlaneseq
    %v1605 = vshrl.u32 %v1604, 7
    %v1606 = vsub.s32 0, %v1605
    %v1607 = vrot.slane %v1602, %v1606
    %v1609 = vadd.f32 %v1598, %v1607
    %v1610 = vadd.f32 %v1601, %v1607
    %vm1611 = vcmask 7168
    %1612 = vst.msk [vmem:[%s11] sm:$0xff] %vm1611, %v1609
    %1613 = vst.msk [vmem:[%s11 + $0x8] sm:$0xff] %vm1611, %v1610
    // Predicated region
    $region46: #{rnn_forward.1} parent=1 // pred_check
      _
    $region47: #{rnn_forward.1} parent=1 // pred_check_branch
      %1615 = sbr.rel (0) target = $region49
    $region48: #{rnn_forward.1} parent=1 // pred_region
      _
    $region49: #{rnn_forward.1} parent=1 // pred_fallthru
      _
    // Predicated region
    $region50: #{rnn_forward.1} parent=1 // pred_check
      _
    $region51: #{rnn_forward.1} parent=1 // pred_check_branch
      %1617 = sbr.rel (0) target = $region53
    $region52: #{rnn_forward.1} parent=1 // pred_region
      %s1619 = ssub.s32 64, 64
      %1620 = vsyncadd [#allocation5], %s1619
      %s1621 = sshll.u32 [#allocation4], 4
      %s1622 = int_to_ptr.vmem [resolvable:$true] %s1621
      %1627 = dma.vmem_to_hbm [thread:$0]  %s1622, 64, %s12, [#allocation5], 32, 32, 2
    $region53: #{rnn_forward.1} parent=1 // pred_fallthru
      _
    // Predicated region
    $region54: #{rnn_forward.1} parent=1 // pred_check
      _
    $region55: #{rnn_forward.1} parent=1 // pred_check_branch
      %1629 = sbr.rel (0) target = $region57
    $region56: #{rnn_forward.1} parent=1 // pred_region
      _
    $region57: #{rnn_forward.1} parent=1 // pred_fallthru
      _
    // Predicated region
    $region58: #{rnn_forward.1} parent=1 // pred_check
      _
    $region59: #{rnn_forward.1} parent=1 // pred_check_branch
      %1631 = sbr.rel (0) target = $region61
    $region60: #{rnn_forward.1} parent=1 // pred_region
      %1632 = dma.done [#allocation5], 64
    $region61: #{rnn_forward.1} parent=1 // pred_fallthru
      _
    %1633 = vsyncpa [#allocation5], 1

</llo_original>
